<compile_context>
chip_gen: v7x
topology: tpu7x:2x2x1
jax: 0.10.0
libtpu: 0.0.40
codegen_flags: <defaults>
</compile_context>

<pallas_src>
import math

import jax
import jax.numpy as jnp
from jax import lax
from jax.experimental import pallas as pl
from jax.experimental.pallas import tpu as pltpu

EPS = 1e-5


# ---------------------------------------------------------------------------
# Helpers: generation-aware VMEM budget and tile pickers
# ---------------------------------------------------------------------------
def _vmem_limit_bytes():
    """~75% of physical VMEM, capped at 100 MiB (v5e/v6e: 128 MiB, v7x: 64 MiB)."""
    try:
        cap = int(pltpu.get_tpu_info().vmem_capacity_bytes)
    except Exception:  # no TPU visible at trace time (e.g. interpret mode)
        cap = 64 * 1024 * 1024
    return max(16 * 1024 * 1024, min(int(cap * 0.75), 100 * 1024 * 1024))


def _pick_batch_tile(B, N, target_rows=256):
    """Smallest divisor of B such that Bt*N rows fill the MXU (>= target_rows)."""
    for d in range(1, B + 1):
        if B % d == 0 and d * N >= target_rows:
            return d
    return B


def _pick_row_tile(M, cap=512):
    """Largest row tile <= cap that divides M (prefer multiples of 8)."""
    if M <= cap:
        return M
    for tr in range(cap, 0, -1):
        if M % tr == 0 and tr % 8 == 0:
            return tr
    for tr in range(cap, 0, -1):
        if M % tr == 0:
            return tr
    return M


# ---------------------------------------------------------------------------
# Kernel A: multi-head attention + "x + dropout(x)" (== 2*x in eval mode)
#           per grid step: a block of Bt batches
# ---------------------------------------------------------------------------
def _make_attn_kernel(n_heads):
    def attn_kernel(x_ref, wqkv_ref, wo_ref, y_ref):
        Bt, N, E = x_ref.shape
        HD = wqkv_ref.shape[1] // 3          # n_heads * head_dim
        D = HD // n_heads
        nf = 1.0 / math.sqrt(D)
        rows = Bt * N
        bf = jnp.bfloat16

        # One fused QKV projection over all Bt*N rows (bf16 MXU fast path).
        x2 = x_ref[...].reshape(rows, E).astype(bf)
        qkv = jnp.dot(x2, wqkv_ref[...],
                      preferred_element_type=jnp.float32)       # (rows, 3*HD) f32

        wo = wo_ref[...]                                         # (HD, E) f32

        out = jnp.zeros((rows, E), jnp.float32)
        for h in range(n_heads):             # static unroll; core batched over Bt
            qh = qkv[:, h * D:(h + 1) * D].reshape(Bt, N, D).astype(bf)
            kh = qkv[:, HD + h * D:HD + (h + 1) * D].reshape(Bt, N, D).astype(bf)
            vh = qkv[:, 2 * HD + h * D:2 * HD + (h + 1) * D].reshape(Bt, N, D).astype(bf)

            # (Bt, N, N) logits: contract on d, batch over Bt -> no explicit K^T.
            compat = nf * lax.dot_general(
                qh, kh, (((2,), (2,)), ((0,), (0,))),
                preferred_element_type=jnp.float32)
            compat = compat - jnp.max(compat, axis=-1, keepdims=True)
            p = jnp.exp(compat)
            attn = p / jnp.sum(p, axis=-1, keepdims=True)        # exact softmax (f32)

            ho = lax.dot_general(
                attn.astype(bf), vh, (((2,), (1,)), ((0,), (0,))),
                preferred_element_type=jnp.float32)              # (Bt, N, D)

            # Fold W_out per head (no lane-dim concatenate of head outputs).
            out = out + jnp.dot(
                ho.reshape(rows, D).astype(bf),
                wo[h * D:(h + 1) * D, :].astype(bf),
                preferred_element_type=jnp.float32)              # (rows, E)

        # x = x + dropout(x); eval-mode dropout is identity -> 2 * x.
        # TODO(synk): training-mode dropout RNG not implemented.
        y_ref[...] = (2.0 * out).reshape(Bt, N, E).astype(y_ref.dtype)

    return attn_kernel


# ---------------------------------------------------------------------------
# Kernel B1: row-tiled BatchNorm statistics accumulation (sum, sum of squares)
# ---------------------------------------------------------------------------
def bn_stats_kernel(y_ref, sum_ref, sq_ref):
    @pl.when(pl.program_id(0) == 0)
    def _():
        sum_ref[...] = jnp.zeros_like(sum_ref)
        sq_ref[...] = jnp.zeros_like(sq_ref)

    y = y_ref[...]
    sum_ref[...] += jnp.sum(y, axis=0, keepdims=True)
    sq_ref[...] += jnp.sum(y * y, axis=0, keepdims=True)


# ---------------------------------------------------------------------------
# Kernel B2: row-tiled  apply-BN1 -> Linear -> ReLU -> Linear  + BN2 stats
# ---------------------------------------------------------------------------
def bn1_ff_kernel(y_ref, s1_ref, b1_ref, w1_ref, fb1_ref, w2_ref, fb2_ref,
                  z_ref, sum_ref, sq_ref):
    @pl.when(pl.program_id(0) == 0)
    def _():
        sum_ref[...] = jnp.zeros_like(sum_ref)
        sq_ref[...] = jnp.zeros_like(sq_ref)

    bf = jnp.bfloat16
    yn = y_ref[...] * s1_ref[...] + b1_ref[...]                  # apply BN1 (f32 math)

    h1 = jnp.dot(yn.astype(bf), w1_ref[...],
                 preferred_element_type=jnp.float32) + fb1_ref[...]
    h1 = jnp.maximum(h1, 0.0)
    z = jnp.dot(h1.astype(bf), w2_ref[...],
                preferred_element_type=jnp.float32) + fb2_ref[...]

    z_ref[...] = z.astype(z_ref.dtype)
    sum_ref[...] += jnp.sum(z, axis=0, keepdims=True)
    sq_ref[...] += jnp.sum(z * z, axis=0, keepdims=True)


# ---------------------------------------------------------------------------
# Kernel B3: row-tiled BN2 apply (elementwise, lane-dense store)
# ---------------------------------------------------------------------------
def bn_apply_kernel(z_ref, s2_ref, b2_ref, o_ref):
    o_ref[...] = (z_ref[...] * s2_ref[...] + b2_ref[...]).astype(o_ref.dtype)


# ---------------------------------------------------------------------------
# Wrapper
# ---------------------------------------------------------------------------
def mha_layer_forward(x, params):
    """x: (B, N, E) float32. Returns (B, N, E)."""
    B, N, E = x.shape
    H, _, D = params['W_query'].shape
    F = params['ff_w1'].shape[0]
    HD = H * D
    M = B * N
    f32, bf = jnp.float32, jnp.bfloat16
    vmem = _vmem_limit_bytes()

    # Fused projection weights; columns/rows ordered (head, dim).
    wq = jnp.transpose(params['W_query'], (1, 0, 2)).reshape(E, HD)
    wk = jnp.transpose(params['W_key'], (1, 0, 2)).reshape(E, HD)
    wv = jnp.transpose(params['W_val'], (1, 0, 2)).reshape(E, HD)
    wqkv = jnp.concatenate([wq, wk, wv], axis=1).astype(bf)      # (E, 3*HD) bf16
    wo = params['W_out'].reshape(HD, E).astype(f32)              # (HD, E) f32 (sliced per head)

    # ---- Kernel A: attention (+2x), grid over Bt-batch blocks ----
    Bt = _pick_batch_tile(B, N)
    # NOTE: wqkv/wo have constant index maps; pl.Buffered(1) could halve their
    # VMEM copies — skipped here to keep the call maximally portable.
    y = pl.pallas_call(
        _make_attn_kernel(H),
        out_shape=jax.ShapeDtypeStruct((B, N, E), f32),
        grid_spec=pltpu.PrefetchScalarGridSpec(
            num_scalar_prefetch=0,
            grid=(B // Bt,),
            in_specs=[
                pl.BlockSpec((Bt, N, E), lambda i: (i, 0, 0)),
                pl.BlockSpec((E, 3 * HD), lambda i: (0, 0)),
                pl.BlockSpec((HD, E), lambda i: (0, 0)),
            ],
            out_specs=pl.BlockSpec((Bt, N, E), lambda i: (i, 0, 0)),
        ),
        compiler_params=pltpu.CompilerParams(
            dimension_semantics=("parallel",), vmem_limit_bytes=vmem),
    )(x.astype(f32), wqkv, wo)

    yf = y.reshape(M, E)
    TR = _pick_row_tile(M)
    GR = M // TR
    row_spec = pl.BlockSpec((TR, E), lambda i: (i, 0))
    vecE = pl.BlockSpec((1, E), lambda i: (0, 0))
    vecF = pl.BlockSpec((1, F), lambda i: (0, 0))

    # ---- Pass 1: BN1 batch statistics (row-tiled accumulation) ----
    s1, q1 = pl.pallas_call(
        bn_stats_kernel,
        out_shape=(jax.ShapeDtypeStruct((1, E), f32),
                   jax.ShapeDtypeStruct((1, E), f32)),
        grid_spec=pltpu.PrefetchScalarGridSpec(
            num_scalar_prefetch=0, grid=(GR,),
            in_specs=[row_spec],
            out_specs=(vecE, vecE)),
        compiler_params=pltpu.CompilerParams(
            dimension_semantics=("arbitrary",), vmem_limit_bytes=vmem),
    )(yf)

    mean1 = s1 / M
    var1 = jnp.maximum(q1 / M - mean1 * mean1, 0.0)
    scale1 = params['norm1_weight'].reshape(1, E) * lax.rsqrt(var1 + EPS)
    shift1 = params['norm1_bias'].reshape(1, E) - mean1 * scale1

    w1t = params['ff_w1'].T.astype(bf)                           # (E, F) bf16
    fb1 = params['ff_b1'].reshape(1, F).astype(f32)
    w2t = params['ff_w2'].T.astype(bf)                           # (F, E) bf16
    fb2 = params['ff_b2'].reshape(1, E).astype(f32)

    # ---- Pass 2: apply BN1, FF (two bf16 MXU matmuls), accumulate BN2 stats ----
    z, s2, q2 = pl.pallas_call(
        bn1_ff_kernel,
        out_shape=(jax.ShapeDtypeStruct((M, E), f32),
                   jax.ShapeDtypeStruct((1, E), f32),
                   jax.ShapeDtypeStruct((1, E), f32)),
        grid_spec=pltpu.PrefetchScalarGridSpec(
            num_scalar_prefetch=0, grid=(GR,),
            in_specs=[row_spec, vecE, vecE,
                      pl.BlockSpec((E, F), lambda i: (0, 0)), vecF,
                      pl.BlockSpec((F, E), lambda i: (0, 0)), vecE],
            out_specs=(row_spec, vecE, vecE)),
        compiler_params=pltpu.CompilerParams(
            dimension_semantics=("arbitrary",), vmem_limit_bytes=vmem),
    )(yf, scale1, shift1, w1t, fb1, w2t, fb2)
    # TODO(synk): on v7x the row axis could be "parallel" across both TensorCores
    # with a small cross-core combine of the BN2 partial stats.

    mean2 = s2 / M
    var2 = jnp.maximum(q2 / M - mean2 * mean2, 0.0)
    scale2 = params['norm2_weight'].reshape(1, E) * lax.rsqrt(var2 + EPS)
    shift2 = params['norm2_bias'].reshape(1, E) - mean2 * scale2

    # ---- Pass 3: apply BN2 (row-tiled, elementwise) ----
    out = pl.pallas_call(
        bn_apply_kernel,
        out_shape=jax.ShapeDtypeStruct((M, E), x.dtype),
        grid_spec=pltpu.PrefetchScalarGridSpec(
            num_scalar_prefetch=0, grid=(GR,),
            in_specs=[row_spec, vecE, vecE],
            out_specs=row_spec),
        compiler_params=pltpu.CompilerParams(
            dimension_semantics=("parallel",), vmem_limit_bytes=vmem),
    )(z, scale2, shift2)

    return out.reshape(B, N, E)


# ---------------------------------------------------------------------------
# Parameter init & pure-JAX reference (same numerics contract: bf16 matmul
# operands, f32 accumulation, f32 elementwise/statistics)
# ---------------------------------------------------------------------------
def init_params(key, n_heads, embed_dim, feed_forward_hidden):
    d = embed_dim // n_heads  # key_dim == val_dim
    ks = jax.random.split(key, 8)

    def u(k, shape, stdv):
        return jax.random.uniform(k, shape, jnp.float32, -stdv, stdv)

    return {
        'W_query': u(ks[0], (n_heads, embed_dim, d), 1.0 / math.sqrt(d)),
        'W_key':   u(ks[1], (n_heads, embed_dim, d), 1.0 / math.sqrt(d)),
        'W_val':   u(ks[2], (n_heads, embed_dim, d), 1.0 / math.sqrt(d)),
        'W_out':   u(ks[3], (n_heads, d, embed_dim), 1.0 / math.sqrt(embed_dim)),
        'ff_w1': u(ks[4], (feed_forward_hidden, embed_dim), 1.0 / math.sqrt(embed_dim)),
        'ff_b1': u(ks[5], (feed_forward_hidden,), 1.0 / math.sqrt(embed_dim)),
        'ff_w2': u(ks[6], (embed_dim, feed_forward_hidden),
                   1.0 / math.sqrt(feed_forward_hidden)),
        'ff_b2': u(ks[7], (embed_dim,), 1.0 / math.sqrt(feed_forward_hidden)),
        'norm1_weight': jnp.ones((embed_dim,), jnp.float32),
        'norm1_bias':   jnp.zeros((embed_dim,), jnp.float32),
        'norm2_weight': jnp.ones((embed_dim,), jnp.float32),
        'norm2_bias':   jnp.zeros((embed_dim,), jnp.float32),
    }


def reference_forward(x, params):
    B, N, E = x.shape
    H, _, D = params['W_query'].shape
    F = params['ff_w1'].shape[0]
    bf = jnp.bfloat16
    nf = 1.0 / math.sqrt(D)

    xf = x.reshape(B * N, E).astype(bf)
    q = jnp.einsum('me,hed->hmd', xf, params['W_query'].astype(bf),
                   preferred_element_type=jnp.float32).reshape(H, B, N, D)
    k = jnp.einsum('me,hed->hmd', xf, params['W_key'].astype(bf),
                   preferred_element_type=jnp.float32).reshape(H, B, N, D)
    v = jnp.einsum('me,hed->hmd', xf, params['W_val'].astype(bf),
                   preferred_element_type=jnp.float32).reshape(H, B, N, D)
    compat = nf * jnp.einsum('hbqd,hbkd->hbqk', q.astype(bf), k.astype(bf),
                             preferred_element_type=jnp.float32)
    attn = jax.nn.softmax(compat, axis=-1)
    heads = jnp.einsum('hbqk,hbkd->hbqd', attn.astype(bf), v.astype(bf),
                       preferred_element_type=jnp.float32)
    out = jnp.einsum('hbqd,hde->bqe', heads.astype(bf), params['W_out'].astype(bf),
                     preferred_element_type=jnp.float32)
    y = (2.0 * out).reshape(B * N, E)              # x + dropout(x), eval mode

    def bn(zz, g, b):
        m = jnp.mean(zz, axis=0, keepdims=True)
        var = jnp.maximum(jnp.mean(zz * zz, axis=0, keepdims=True) - m * m, 0.0)
        s = g.reshape(1, E) * lax.rsqrt(var + EPS)
        return zz * s + (b.reshape(1, E) - m * s)

    yn = bn(y, params['norm1_weight'], params['norm1_bias'])
    h1 = jnp.dot(yn.astype(bf), params['ff_w1'].T.astype(bf),
                 preferred_element_type=jnp.float32) + params['ff_b1'].reshape(1, F)
    h1 = jnp.maximum(h1, 0.0)
    z = jnp.dot(h1.astype(bf), params['ff_w2'].T.astype(bf),
                preferred_element_type=jnp.float32) + params['ff_b2'].reshape(1, E)
    zn = bn(z, params['norm2_weight'], params['norm2_bias'])
    return zn.reshape(B, N, E).astype(x.dtype)


if __name__ == "__main__":
    B, N, E, H, FF = 2, 8, 32, 4, 64
    key = jax.random.PRNGKey(0)
    kx, kp = jax.random.split(key)
    x = jax.random.normal(kx, (B, N, E), jnp.float32)
    params = init_params(kp, n_heads=H, embed_dim=E, feed_forward_hidden=FF)

    out = jax.jit(mha_layer_forward)(x, params)
    out = jax.block_until_ready(out)

    ref = reference_forward(x, params)
    assert out.shape == (B, N, E)
    max_err = float(jnp.max(jnp.abs(out - ref)))
    # Kernel and reference share the same numerics contract (bf16 MXU operands,
    # f32 accumulation, exact softmax, f32 BN stats); remaining differences are
    # accumulation-order / transcendental-implementation level, well below 1e-2.
    assert jnp.allclose(out, ref, atol=1e-2, rtol=1e-2), (
        f"mismatch vs JAX reference (max abs err {max_err:.3e})")
    print("KERNEL_OK")
</pallas_src>

<mosaic_0001>
module attributes {stable_mosaic.version = 11 : i64} {
  func.func @bn_stats_kernel(%arg0: i32, %arg1: memref<16x32xf32, #tpu.memory_space<vmem>>, %arg2: memref<1x32xf32, #tpu.memory_space<vmem>>, %arg3: memref<1x32xf32, #tpu.memory_space<vmem>>) attributes {dimension_semantics = [#tpu.dimension_semantics<arbitrary>], iteration_bounds = array<i64: 1>, scalar_prefetch = 0 : i64, scratch_operands = 0 : i64, tpu.core_type = #tpu.core_type<tc>, window_params = [{transform_indices = @transform_0, window_bounds = array<i64: 16, 32>}, {pipeline_mode = #tpu.pipeline_mode<synchronous>, transform_indices = @transform_1, window_bounds = array<i64: 1, 32>}, {pipeline_mode = #tpu.pipeline_mode<synchronous>, transform_indices = @transform_2, window_bounds = array<i64: 1, 32>}]} {
    %c0_i32 = arith.constant 0 : i32
    %0 = arith.cmpi eq, %arg0, %c0_i32 : i32
    %1 = arith.extui %0 : i1 to i32
    %c0_i32_0 = arith.constant 0 : i32
    %2 = arith.cmpi ne, %1, %c0_i32_0 : i32
    scf.if %2 {
      %cst_11 = arith.constant 0.000000e+00 : f32
      %15 = vector.broadcast %cst_11 : f32 to vector<1x32xf32>
      %c0_12 = arith.constant 0 : index
      %c0_13 = arith.constant 0 : index
      %16 = vector.load %arg2[%c0_12, %c0_13] : memref<1x32xf32, #tpu.memory_space<vmem>>, vector<1x32xf32>
      tpu.vector_store %arg2[%c0_12, %c0_13], %15 {strides = array<i32>} : memref<1x32xf32, #tpu.memory_space<vmem>>, vector<1x32xf32>,
      %cst_14 = arith.constant 0.000000e+00 : f32
      %17 = vector.broadcast %cst_14 : f32 to vector<1x32xf32>
      %c0_15 = arith.constant 0 : index
      %c0_16 = arith.constant 0 : index
      %18 = vector.load %arg3[%c0_15, %c0_16] : memref<1x32xf32, #tpu.memory_space<vmem>>, vector<1x32xf32>
      tpu.vector_store %arg3[%c0_15, %c0_16], %17 {strides = array<i32>} : memref<1x32xf32, #tpu.memory_space<vmem>>, vector<1x32xf32>,
    } else {
    }
    %c0 = arith.constant 0 : index
    %c0_1 = arith.constant 0 : index
    %3 = vector.load %arg1[%c0, %c0_1] : memref<16x32xf32, #tpu.memory_space<vmem>>, vector<16x32xf32>
    %c0_2 = arith.constant 0 : index
    %c0_3 = arith.constant 0 : index
    %4 = vector.load %arg2[%c0_2, %c0_3] : memref<1x32xf32, #tpu.memory_space<vmem>>, vector<1x32xf32>
    %cst = arith.constant dense<0.000000e+00> : vector<32xf32>
    %5 = vector.multi_reduction <add>, %3, %cst [0] : vector<16x32xf32> to vector<32xf32>
    %6 = vector.shape_cast %5 : vector<32xf32> to vector<1x32xf32>
    %7 = arith.addf %4, %6 : vector<1x32xf32>
    %c0_4 = arith.constant 0 : index
    %c0_5 = arith.constant 0 : index
    %8 = vector.load %arg2[%c0_4, %c0_5] : memref<1x32xf32, #tpu.memory_space<vmem>>, vector<1x32xf32>
    tpu.vector_store %arg2[%c0_4, %c0_5], %7 {strides = array<i32>} : memref<1x32xf32, #tpu.memory_space<vmem>>, vector<1x32xf32>,
    %c0_6 = arith.constant 0 : index
    %c0_7 = arith.constant 0 : index
    %9 = vector.load %arg3[%c0_6, %c0_7] : memref<1x32xf32, #tpu.memory_space<vmem>>, vector<1x32xf32>
    %10 = arith.mulf %3, %3 : vector<16x32xf32>
    %cst_8 = arith.constant dense<0.000000e+00> : vector<32xf32>
    %11 = vector.multi_reduction <add>, %10, %cst_8 [0] : vector<16x32xf32> to vector<32xf32>
    %12 = vector.shape_cast %11 : vector<32xf32> to vector<1x32xf32>
    %13 = arith.addf %9, %12 : vector<1x32xf32>
    %c0_9 = arith.constant 0 : index
    %c0_10 = arith.constant 0 : index
    %14 = vector.load %arg3[%c0_9, %c0_10] : memref<1x32xf32, #tpu.memory_space<vmem>>, vector<1x32xf32>
    tpu.vector_store %arg3[%c0_9, %c0_10], %13 {strides = array<i32>} : memref<1x32xf32, #tpu.memory_space<vmem>>, vector<1x32xf32>,
    return
  }
  func.func @transform_0(%arg0: i32) -> (i32, i32) {
    %c0_i32 = arith.constant 0 : i32
    %c0_i32_0 = arith.constant 0 : i32
    return %arg0, %c0_i32 : i32, i32
  }
  func.func @transform_1(%arg0: i32) -> (i32, i32) {
    %c0_i32 = arith.constant 0 : i32
    %c0_i32_0 = arith.constant 0 : i32
    %c0_i32_1 = arith.constant 0 : i32
    return %c0_i32, %c0_i32_0 : i32, i32
  }
  func.func @transform_2(%arg0: i32) -> (i32, i32) {
    %c0_i32 = arith.constant 0 : i32
    %c0_i32_0 = arith.constant 0 : i32
    %c0_i32_1 = arith.constant 0 : i32
    return %c0_i32, %c0_i32_0 : i32, i32
  }
}

module attributes {stable_mosaic.version = 11 : i64} {
  func.func @attn_kernel(%arg0: i32, %arg1: memref<2x8x32xf32, #tpu.memory_space<vmem>>, %arg2: memref<32x96xbf16, #tpu.memory_space<vmem>>, %arg3: memref<32x32xf32, #tpu.memory_space<vmem>>, %arg4: memref<2x8x32xf32, #tpu.memory_space<vmem>>) attributes {dimension_semantics = [#tpu.dimension_semantics<parallel>], iteration_bounds = array<i64: 1>, scalar_prefetch = 0 : i64, scratch_operands = 0 : i64, tpu.core_type = #tpu.core_type<tc>, window_params = [{transform_indices = @transform_0, window_bounds = array<i64: 2, 8, 32>}, {pipeline_mode = #tpu.pipeline_mode<synchronous>, transform_indices = @transform_1, window_bounds = array<i64: 32, 96>}, {pipeline_mode = #tpu.pipeline_mode<synchronous>, transform_indices = @transform_2, window_bounds = array<i64: 32, 32>}, {transform_indices = @transform_3, window_bounds = array<i64: 2, 8, 32>}]} {
    %c0 = arith.constant 0 : index
    %c0_0 = arith.constant 0 : index
    %c0_1 = arith.constant 0 : index
    %0 = vector.load %arg1[%c0, %c0_0, %c0_1] : memref<2x8x32xf32, #tpu.memory_space<vmem>>, vector<2x8x32xf32>
    %1 = vector.shape_cast %0 : vector<2x8x32xf32> to vector<16x32xf32>
    %2 = arith.truncf %1 : vector<16x32xf32> to vector<16x32xbf16>
    %c0_2 = arith.constant 0 : index
    %c0_3 = arith.constant 0 : index
    %3 = vector.load %arg2[%c0_2, %c0_3] : memref<32x96xbf16, #tpu.memory_space<vmem>>, vector<32x96xbf16>
    %cst = arith.constant dense<0.000000e+00> : vector<16x96xf32>
    %4 = tpu.matmul %2, %3, %cst {dimension_numbers = #tpu.dot_dimension_numbers<[1], [0], [0], [1], [0, 0, 1, 1], [], []>} : vector<16x32xbf16>, vector<32x96xbf16>, vector<16x96xf32> -> vector<16x96xf32>
    %c0_4 = arith.constant 0 : index
    %c0_5 = arith.constant 0 : index
    %5 = vector.load %arg3[%c0_4, %c0_5] : memref<32x32xf32, #tpu.memory_space<vmem>>, vector<32x32xf32>
    %cst_6 = arith.constant 0.000000e+00 : f32
    %6 = vector.broadcast %cst_6 : f32 to vector<16x32xf32>
    %7 = vector.extract_strided_slice %4 {offsets = [0, 0], sizes = [16, 8], strides = [1, 1]} : vector<16x96xf32> to vector<16x8xf32>
    %8 = vector.shape_cast %7 : vector<16x8xf32> to vector<2x8x8xf32>
    %9 = arith.truncf %8 : vector<2x8x8xf32> to vector<2x8x8xbf16>
    %10 = vector.extract_strided_slice %4 {offsets = [0, 32], sizes = [16, 8], strides = [1, 1]} : vector<16x96xf32> to vector<16x8xf32>
    %11 = vector.shape_cast %10 : vector<16x8xf32> to vector<2x8x8xf32>
    %12 = arith.truncf %11 : vector<2x8x8xf32> to vector<2x8x8xbf16>
    %13 = vector.extract_strided_slice %4 {offsets = [0, 64], sizes = [16, 8], strides = [1, 1]} : vector<16x96xf32> to vector<16x8xf32>
    %14 = vector.shape_cast %13 : vector<16x8xf32> to vector<2x8x8xf32>
    %15 = arith.truncf %14 : vector<2x8x8xf32> to vector<2x8x8xbf16>
    %cst_7 = arith.constant dense<0.000000e+00> : vector<2x8x8xf32>
    %16 = tpu.matmul %9, %12, %cst_7 {dimension_numbers = #tpu.dot_dimension_numbers<[2], [2], [1], [1], [0, 0, 0, 1, 1, 1], [0], [0]>} : vector<2x8x8xbf16>, vector<2x8x8xbf16>, vector<2x8x8xf32> -> vector<2x8x8xf32>
    %cst_8 = arith.constant 0.353553385 : f32
    %17 = vector.broadcast %cst_8 : f32 to vector<2x8x8xf32>
    %18 = arith.mulf %17, %16 : vector<2x8x8xf32>
    %cst_9 = arith.constant dense<0xFF800000> : vector<2x8xf32>
    %19 = vector.multi_reduction <maximumf>, %18, %cst_9 [2] : vector<2x8x8xf32> to vector<2x8xf32>
    %20 = vector.shape_cast %19 : vector<2x8xf32> to vector<2x8x1xf32>
    %21 = vector.broadcast %20 : vector<2x8x1xf32> to vector<2x8x8xf32>
    %22 = arith.subf %18, %21 : vector<2x8x8xf32>
    %23 = math.exp %22 : vector<2x8x8xf32>
    %cst_10 = arith.constant dense<0.000000e+00> : vector<2x8xf32>
    %24 = vector.multi_reduction <add>, %23, %cst_10 [2] : vector<2x8x8xf32> to vector<2x8xf32>
    %25 = vector.shape_cast %24 : vector<2x8xf32> to vector<2x8x1xf32>
    %26 = vector.broadcast %25 : vector<2x8x1xf32> to vector<2x8x8xf32>
    %27 = arith.divf %23, %26 : vector<2x8x8xf32>
    %28 = arith.truncf %27 : vector<2x8x8xf32> to vector<2x8x8xbf16>
    %cst_11 = arith.constant dense<0.000000e+00> : vector<2x8x8xf32>
    %29 = tpu.matmul %28, %15, %cst_11 {dimension_numbers = #tpu.dot_dimension_numbers<[2], [1], [1], [2], [0, 0, 0, 1, 1, 2], [0], [0]>} : vector<2x8x8xbf16>, vector<2x8x8xbf16>, vector<2x8x8xf32> -> vector<2x8x8xf32>
    %30 = vector.shape_cast %29 : vector<2x8x8xf32> to vector<16x8xf32>
    %31 = arith.truncf %30 : vector<16x8xf32> to vector<16x8xbf16>
    %32 = vector.extract_strided_slice %5 {offsets = [0, 0], sizes = [8, 32], strides = [1, 1]} : vector<32x32xf32> to vector<8x32xf32>
    %33 = arith.truncf %32 : vector<8x32xf32> to vector<8x32xbf16>
    %cst_12 = arith.constant dense<0.000000e+00> : vector<16x32xf32>
    %34 = tpu.matmul %31, %33, %cst_12 {dimension_numbers = #tpu.dot_dimension_numbers<[1], [0], [0], [1], [0, 0, 1, 1], [], []>} : vector<16x8xbf16>, vector<8x32xbf16>, vector<16x32xf32> -> vector<16x32xf32>
    %35 = arith.addf %6, %34 : vector<16x32xf32>
    %36 = vector.extract_strided_slice %4 {offsets = [0, 8], sizes = [16, 8], strides = [1, 1]} : vector<16x96xf32> to vector<16x8xf32>
    %37 = vector.shape_cast %36 : vector<16x8xf32> to vector<2x8x8xf32>
    %38 = arith.truncf %37 : vector<2x8x8xf32> to vector<2x8x8xbf16>
    %39 = vector.extract_strided_slice %4 {offsets = [0, 40], sizes = [16, 8], strides = [1, 1]} : vector<16x96xf32> to vector<16x8xf32>
    %40 = vector.shape_cast %39 : vector<16x8xf32> to vector<2x8x8xf32>
    %41 = arith.truncf %40 : vector<2x8x8xf32> to vector<2x8x8xbf16>
    %42 = vector.extract_strided_slice %4 {offsets = [0, 72], sizes = [16, 8], strides = [1, 1]} : vector<16x96xf32> to vector<16x8xf32>
    %43 = vector.shape_cast %42 : vector<16x8xf32> to vector<2x8x8xf32>
    %44 = arith.truncf %43 : vector<2x8x8xf32> to vector<2x8x8xbf16>
    %cst_13 = arith.constant dense<0.000000e+00> : vector<2x8x8xf32>
    %45 = tpu.matmul %38, %41, %cst_13 {dimension_numbers = #tpu.dot_dimension_numbers<[2], [2], [1], [1], [0, 0, 0, 1, 1, 1], [0], [0]>} : vector<2x8x8xbf16>, vector<2x8x8xbf16>, vector<2x8x8xf32> -> vector<2x8x8xf32>
    %cst_14 = arith.constant 0.353553385 : f32
    %46 = vector.broadcast %cst_14 : f32 to vector<2x8x8xf32>
    %47 = arith.mulf %46, %45 : vector<2x8x8xf32>
    %cst_15 = arith.constant dense<0xFF800000> : vector<2x8xf32>
    %48 = vector.multi_reduction <maximumf>, %47, %cst_15 [2] : vector<2x8x8xf32> to vector<2x8xf32>
    %49 = vector.shape_cast %48 : vector<2x8xf32> to vector<2x8x1xf32>
    %50 = vector.broadcast %49 : vector<2x8x1xf32> to vector<2x8x8xf32>
    %51 = arith.subf %47, %50 : vector<2x8x8xf32>
    %52 = math.exp %51 : vector<2x8x8xf32>
    %cst_16 = arith.constant dense<0.000000e+00> : vector<2x8xf32>
    %53 = vector.multi_reduction <add>, %52, %cst_16 [2] : vector<2x8x8xf32> to vector<2x8xf32>
    %54 = vector.shape_cast %53 : vector<2x8xf32> to vector<2x8x1xf32>
    %55 = vector.broadcast %54 : vector<2x8x1xf32> to vector<2x8x8xf32>
    %56 = arith.divf %52, %55 : vector<2x8x8xf32>
    %57 = arith.truncf %56 : vector<2x8x8xf32> to vector<2x8x8xbf16>
    %cst_17 = arith.constant dense<0.000000e+00> : vector<2x8x8xf32>
    %58 = tpu.matmul %57, %44, %cst_17 {dimension_numbers = #tpu.dot_dimension_numbers<[2], [1], [1], [2], [0, 0, 0, 1, 1, 2], [0], [0]>} : vector<2x8x8xbf16>, vector<2x8x8xbf16>, vector<2x8x8xf32> -> vector<2x8x8xf32>
    %59 = vector.shape_cast %58 : vector<2x8x8xf32> to vector<16x8xf32>
    %60 = arith.truncf %59 : vector<16x8xf32> to vector<16x8xbf16>
    %61 = vector.extract_strided_slice %5 {offsets = [8, 0], sizes = [8, 32], strides = [1, 1]} : vector<32x32xf32> to vector<8x32xf32>
    %62 = arith.truncf %61 : vector<8x32xf32> to vector<8x32xbf16>
    %cst_18 = arith.constant dense<0.000000e+00> : vector<16x32xf32>
    %63 = tpu.matmul %60, %62, %cst_18 {dimension_numbers = #tpu.dot_dimension_numbers<[1], [0], [0], [1], [0, 0, 1, 1], [], []>} : vector<16x8xbf16>, vector<8x32xbf16>, vector<16x32xf32> -> vector<16x32xf32>
    %64 = arith.addf %35, %63 : vector<16x32xf32>
    %65 = vector.extract_strided_slice %4 {offsets = [0, 16], sizes = [16, 8], strides = [1, 1]} : vector<16x96xf32> to vector<16x8xf32>
    %66 = vector.shape_cast %65 : vector<16x8xf32> to vector<2x8x8xf32>
    %67 = arith.truncf %66 : vector<2x8x8xf32> to vector<2x8x8xbf16>
    %68 = vector.extract_strided_slice %4 {offsets = [0, 48], sizes = [16, 8], strides = [1, 1]} : vector<16x96xf32> to vector<16x8xf32>
    %69 = vector.shape_cast %68 : vector<16x8xf32> to vector<2x8x8xf32>
    %70 = arith.truncf %69 : vector<2x8x8xf32> to vector<2x8x8xbf16>
    %71 = vector.extract_strided_slice %4 {offsets = [0, 80], sizes = [16, 8], strides = [1, 1]} : vector<16x96xf32> to vector<16x8xf32>
    %72 = vector.shape_cast %71 : vector<16x8xf32> to vector<2x8x8xf32>
    %73 = arith.truncf %72 : vector<2x8x8xf32> to vector<2x8x8xbf16>
    %cst_19 = arith.constant dense<0.000000e+00> : vector<2x8x8xf32>
    %74 = tpu.matmul %67, %70, %cst_19 {dimension_numbers = #tpu.dot_dimension_numbers<[2], [2], [1], [1], [0, 0, 0, 1, 1, 1], [0], [0]>} : vector<2x8x8xbf16>, vector<2x8x8xbf16>, vector<2x8x8xf32> -> vector<2x8x8xf32>
    %cst_20 = arith.constant 0.353553385 : f32
    %75 = vector.broadcast %cst_20 : f32 to vector<2x8x8xf32>
    %76 = arith.mulf %75, %74 : vector<2x8x8xf32>
    %cst_21 = arith.constant dense<0xFF800000> : vector<2x8xf32>
    %77 = vector.multi_reduction <maximumf>, %76, %cst_21 [2] : vector<2x8x8xf32> to vector<2x8xf32>
    %78 = vector.shape_cast %77 : vector<2x8xf32> to vector<2x8x1xf32>
    %79 = vector.broadcast %78 : vector<2x8x1xf32> to vector<2x8x8xf32>
    %80 = arith.subf %76, %79 : vector<2x8x8xf32>
    %81 = math.exp %80 : vector<2x8x8xf32>
    %cst_22 = arith.constant dense<0.000000e+00> : vector<2x8xf32>
    %82 = vector.multi_reduction <add>, %81, %cst_22 [2] : vector<2x8x8xf32> to vector<2x8xf32>
    %83 = vector.shape_cast %82 : vector<2x8xf32> to vector<2x8x1xf32>
    %84 = vector.broadcast %83 : vector<2x8x1xf32> to vector<2x8x8xf32>
    %85 = arith.divf %81, %84 : vector<2x8x8xf32>
    %86 = arith.truncf %85 : vector<2x8x8xf32> to vector<2x8x8xbf16>
    %cst_23 = arith.constant dense<0.000000e+00> : vector<2x8x8xf32>
    %87 = tpu.matmul %86, %73, %cst_23 {dimension_numbers = #tpu.dot_dimension_numbers<[2], [1], [1], [2], [0, 0, 0, 1, 1, 2], [0], [0]>} : vector<2x8x8xbf16>, vector<2x8x8xbf16>, vector<2x8x8xf32> -> vector<2x8x8xf32>
    %88 = vector.shape_cast %87 : vector<2x8x8xf32> to vector<16x8xf32>
    %89 = arith.truncf %88 : vector<16x8xf32> to vector<16x8xbf16>
    %90 = vector.extract_strided_slice %5 {offsets = [16, 0], sizes = [8, 32], strides = [1, 1]} : vector<32x32xf32> to vector<8x32xf32>
    %91 = arith.truncf %90 : vector<8x32xf32> to vector<8x32xbf16>
    %cst_24 = arith.constant dense<0.000000e+00> : vector<16x32xf32>
    %92 = tpu.matmul %89, %91, %cst_24 {dimension_numbers = #tpu.dot_dimension_numbers<[1], [0], [0], [1], [0, 0, 1, 1], [], []>} : vector<16x8xbf16>, vector<8x32xbf16>, vector<16x32xf32> -> vector<16x32xf32>
    %93 = arith.addf %64, %92 : vector<16x32xf32>
    %94 = vector.extract_strided_slice %4 {offsets = [0, 24], sizes = [16, 8], strides = [1, 1]} : vector<16x96xf32> to vector<16x8xf32>
    %95 = vector.shape_cast %94 : vector<16x8xf32> to vector<2x8x8xf32>
    %96 = arith.truncf %95 : vector<2x8x8xf32> to vector<2x8x8xbf16>
    %97 = vector.extract_strided_slice %4 {offsets = [0, 56], sizes = [16, 8], strides = [1, 1]} : vector<16x96xf32> to vector<16x8xf32>
    %98 = vector.shape_cast %97 : vector<16x8xf32> to vector<2x8x8xf32>
    %99 = arith.truncf %98 : vector<2x8x8xf32> to vector<2x8x8xbf16>
    %100 = vector.extract_strided_slice %4 {offsets = [0, 88], sizes = [16, 8], strides = [1, 1]} : vector<16x96xf32> to vector<16x8xf32>
    %101 = vector.shape_cast %100 : vector<16x8xf32> to vector<2x8x8xf32>
    %102 = arith.truncf %101 : vector<2x8x8xf32> to vector<2x8x8xbf16>
    %cst_25 = arith.constant dense<0.000000e+00> : vector<2x8x8xf32>
    %103 = tpu.matmul %96, %99, %cst_25 {dimension_numbers = #tpu.dot_dimension_numbers<[2], [2], [1], [1], [0, 0, 0, 1, 1, 1], [0], [0]>} : vector<2x8x8xbf16>, vector<2x8x8xbf16>, vector<2x8x8xf32> -> vector<2x8x8xf32>
    %cst_26 = arith.constant 0.353553385 : f32
    %104 = vector.broadcast %cst_26 : f32 to vector<2x8x8xf32>
    %105 = arith.mulf %104, %103 : vector<2x8x8xf32>
    %cst_27 = arith.constant dense<0xFF800000> : vector<2x8xf32>
    %106 = vector.multi_reduction <maximumf>, %105, %cst_27 [2] : vector<2x8x8xf32> to vector<2x8xf32>
    %107 = vector.shape_cast %106 : vector<2x8xf32> to vector<2x8x1xf32>
    %108 = vector.broadcast %107 : vector<2x8x1xf32> to vector<2x8x8xf32>
    %109 = arith.subf %105, %108 : vector<2x8x8xf32>
    %110 = math.exp %109 : vector<2x8x8xf32>
    %cst_28 = arith.constant dense<0.000000e+00> : vector<2x8xf32>
    %111 = vector.multi_reduction <add>, %110, %cst_28 [2] : vector<2x8x8xf32> to vector<2x8xf32>
    %112 = vector.shape_cast %111 : vector<2x8xf32> to vector<2x8x1xf32>
    %113 = vector.broadcast %112 : vector<2x8x1xf32> to vector<2x8x8xf32>
    %114 = arith.divf %110, %113 : vector<2x8x8xf32>
    %115 = arith.truncf %114 : vector<2x8x8xf32> to vector<2x8x8xbf16>
    %cst_29 = arith.constant dense<0.000000e+00> : vector<2x8x8xf32>
    %116 = tpu.matmul %115, %102, %cst_29 {dimension_numbers = #tpu.dot_dimension_numbers<[2], [1], [1], [2], [0, 0, 0, 1, 1, 2], [0], [0]>} : vector<2x8x8xbf16>, vector<2x8x8xbf16>, vector<2x8x8xf32> -> vector<2x8x8xf32>
    %117 = vector.shape_cast %116 : vector<2x8x8xf32> to vector<16x8xf32>
    %118 = arith.truncf %117 : vector<16x8xf32> to vector<16x8xbf16>
    %119 = vector.extract_strided_slice %5 {offsets = [24, 0], sizes = [8, 32], strides = [1, 1]} : vector<32x32xf32> to vector<8x32xf32>
    %120 = arith.truncf %119 : vector<8x32xf32> to vector<8x32xbf16>
    %cst_30 = arith.constant dense<0.000000e+00> : vector<16x32xf32>
    %121 = tpu.matmul %118, %120, %cst_30 {dimension_numbers = #tpu.dot_dimension_numbers<[1], [0], [0], [1], [0, 0, 1, 1], [], []>} : vector<16x8xbf16>, vector<8x32xbf16>, vector<16x32xf32> -> vector<16x32xf32>
    %122 = arith.addf %93, %121 : vector<16x32xf32>
    %cst_31 = arith.constant 2.000000e+00 : f32
    %123 = vector.broadcast %cst_31 : f32 to vector<16x32xf32>
    %124 = arith.mulf %123, %122 : vector<16x32xf32>
    %125 = vector.shape_cast %124 : vector<16x32xf32> to vector<2x8x32xf32>
    %c0_32 = arith.constant 0 : index
    %c0_33 = arith.constant 0 : index
    %c0_34 = arith.constant 0 : index
    %126 = vector.load %arg4[%c0_32, %c0_33, %c0_34] : memref<2x8x32xf32, #tpu.memory_space<vmem>>, vector<2x8x32xf32>
    tpu.vector_store %arg4[%c0_32, %c0_33, %c0_34], %125 {strides = array<i32>} : memref<2x8x32xf32, #tpu.memory_space<vmem>>, vector<2x8x32xf32>,
    return
  }
  func.func @transform_0(%arg0: i32) -> (i32, i32, i32) {
    %c0_i32 = arith.constant 0 : i32
    %c0_i32_0 = arith.constant 0 : i32
    %c0_i32_1 = arith.constant 0 : i32
    return %arg0, %c0_i32, %c0_i32_0 : i32, i32, i32
  }
  func.func @transform_1(%arg0: i32) -> (i32, i32) {
    %c0_i32 = arith.constant 0 : i32
    %c0_i32_0 = arith.constant 0 : i32
    %c0_i32_1 = arith.constant 0 : i32
    return %c0_i32, %c0_i32_0 : i32, i32
  }
  func.func @transform_2(%arg0: i32) -> (i32, i32) {
    %c0_i32 = arith.constant 0 : i32
    %c0_i32_0 = arith.constant 0 : i32
    %c0_i32_1 = arith.constant 0 : i32
    return %c0_i32, %c0_i32_0 : i32, i32
  }
  func.func @transform_3(%arg0: i32) -> (i32, i32, i32) {
    %c0_i32 = arith.constant 0 : i32
    %c0_i32_0 = arith.constant 0 : i32
    %c0_i32_1 = arith.constant 0 : i32
    return %arg0, %c0_i32, %c0_i32_0 : i32, i32, i32
  }
}

module attributes {stable_mosaic.version = 11 : i64} {
  func.func @bn1_ff_kernel(%arg0: i32, %arg1: memref<16x32xf32, #tpu.memory_space<vmem>>, %arg2: memref<1x32xf32, #tpu.memory_space<vmem>>, %arg3: memref<1x32xf32, #tpu.memory_space<vmem>>, %arg4: memref<32x64xbf16, #tpu.memory_space<vmem>>, %arg5: memref<1x64xf32, #tpu.memory_space<vmem>>, %arg6: memref<64x32xbf16, #tpu.memory_space<vmem>>, %arg7: memref<1x32xf32, #tpu.memory_space<vmem>>, %arg8: memref<16x32xf32, #tpu.memory_space<vmem>>, %arg9: memref<1x32xf32, #tpu.memory_space<vmem>>, %arg10: memref<1x32xf32, #tpu.memory_space<vmem>>) attributes {dimension_semantics = [#tpu.dimension_semantics<arbitrary>], iteration_bounds = array<i64: 1>, scalar_prefetch = 0 : i64, scratch_operands = 0 : i64, tpu.core_type = #tpu.core_type<tc>, window_params = [{transform_indices = @transform_0, window_bounds = array<i64: 16, 32>}, {pipeline_mode = #tpu.pipeline_mode<synchronous>, transform_indices = @transform_1, window_bounds = array<i64: 1, 32>}, {pipeline_mode = #tpu.pipeline_mode<synchronous>, transform_indices = @transform_2, window_bounds = array<i64: 1, 32>}, {pipeline_mode = #tpu.pipeline_mode<synchronous>, transform_indices = @transform_3, window_bounds = array<i64: 32, 64>}, {pipeline_mode = #tpu.pipeline_mode<synchronous>, transform_indices = @transform_4, window_bounds = array<i64: 1, 64>}, {pipeline_mode = #tpu.pipeline_mode<synchronous>, transform_indices = @transform_5, window_bounds = array<i64: 64, 32>}, {pipeline_mode = #tpu.pipeline_mode<synchronous>, transform_indices = @transform_6, window_bounds = array<i64: 1, 32>}, {transform_indices = @transform_7, window_bounds = array<i64: 16, 32>}, {pipeline_mode = #tpu.pipeline_mode<synchronous>, transform_indices = @transform_8, window_bounds = array<i64: 1, 32>}, {pipeline_mode = #tpu.pipeline_mode<synchronous>, transform_indices = @transform_9, window_bounds = array<i64: 1, 32>}]} {
    %c0_i32 = arith.constant 0 : i32
    %0 = arith.cmpi eq, %arg0, %c0_i32 : i32
    %1 = arith.extui %0 : i1 to i32
    %c0_i32_0 = arith.constant 0 : i32
    %2 = arith.cmpi ne, %1, %c0_i32_0 : i32
    scf.if %2 {
      %cst_28 = arith.constant 0.000000e+00 : f32
      %36 = vector.broadcast %cst_28 : f32 to vector<1x32xf32>
      %c0_29 = arith.constant 0 : index
      %c0_30 = arith.constant 0 : index
      %37 = vector.load %arg9[%c0_29, %c0_30] : memref<1x32xf32, #tpu.memory_space<vmem>>, vector<1x32xf32>
      tpu.vector_store %arg9[%c0_29, %c0_30], %36 {strides = array<i32>} : memref<1x32xf32, #tpu.memory_space<vmem>>, vector<1x32xf32>,
      %cst_31 = arith.constant 0.000000e+00 : f32
      %38 = vector.broadcast %cst_31 : f32 to vector<1x32xf32>
      %c0_32 = arith.constant 0 : index
      %c0_33 = arith.constant 0 : index
      %39 = vector.load %arg10[%c0_32, %c0_33] : memref<1x32xf32, #tpu.memory_space<vmem>>, vector<1x32xf32>
      tpu.vector_store %arg10[%c0_32, %c0_33], %38 {strides = array<i32>} : memref<1x32xf32, #tpu.memory_space<vmem>>, vector<1x32xf32>,
    } else {
    }
    %c0 = arith.constant 0 : index
    %c0_1 = arith.constant 0 : index
    %3 = vector.load %arg1[%c0, %c0_1] : memref<16x32xf32, #tpu.memory_space<vmem>>, vector<16x32xf32>
    %c0_2 = arith.constant 0 : index
    %c0_3 = arith.constant 0 : index
    %4 = vector.load %arg2[%c0_2, %c0_3] : memref<1x32xf32, #tpu.memory_space<vmem>>, vector<1x32xf32>
    %5 = vector.broadcast %4 : vector<1x32xf32> to vector<16x32xf32>
    %6 = arith.mulf %3, %5 : vector<16x32xf32>
    %c0_4 = arith.constant 0 : index
    %c0_5 = arith.constant 0 : index
    %7 = vector.load %arg3[%c0_4, %c0_5] : memref<1x32xf32, #tpu.memory_space<vmem>>, vector<1x32xf32>
    %8 = vector.broadcast %7 : vector<1x32xf32> to vector<16x32xf32>
    %9 = arith.addf %6, %8 : vector<16x32xf32>
    %10 = arith.truncf %9 : vector<16x32xf32> to vector<16x32xbf16>
    %c0_6 = arith.constant 0 : index
    %c0_7 = arith.constant 0 : index
    %11 = vector.load %arg4[%c0_6, %c0_7] : memref<32x64xbf16, #tpu.memory_space<vmem>>, vector<32x64xbf16>
    %cst = arith.constant dense<0.000000e+00> : vector<16x64xf32>
    %12 = tpu.matmul %10, %11, %cst {dimension_numbers = #tpu.dot_dimension_numbers<[1], [0], [0], [1], [0, 0, 1, 1], [], []>} : vector<16x32xbf16>, vector<32x64xbf16>, vector<16x64xf32> -> vector<16x64xf32>
    %c0_8 = arith.constant 0 : index
    %c0_9 = arith.constant 0 : index
    %13 = vector.load %arg5[%c0_8, %c0_9] : memref<1x64xf32, #tpu.memory_space<vmem>>, vector<1x64xf32>
    %14 = vector.broadcast %13 : vector<1x64xf32> to vector<16x64xf32>
    %15 = arith.addf %12, %14 : vector<16x64xf32>
    %cst_10 = arith.constant 0.000000e+00 : f32
    %16 = vector.broadcast %cst_10 : f32 to vector<16x64xf32>
    %17 = arith.maximumf %15, %16 : vector<16x64xf32>
    %18 = arith.truncf %17 : vector<16x64xf32> to vector<16x64xbf16>
    %c0_11 = arith.constant 0 : index
    %c0_12 = arith.constant 0 : index
    %19 = vector.load %arg6[%c0_11, %c0_12] : memref<64x32xbf16, #tpu.memory_space<vmem>>, vector<64x32xbf16>
    %cst_13 = arith.constant dense<0.000000e+00> : vector<16x32xf32>
    %20 = tpu.matmul %18, %19, %cst_13 {dimension_numbers = #tpu.dot_dimension_numbers<[1], [0], [0], [1], [0, 0, 1, 1], [], []>} : vector<16x64xbf16>, vector<64x32xbf16>, vector<16x32xf32> -> vector<16x32xf32>
    %c0_14 = arith.constant 0 : index
    %c0_15 = arith.constant 0 : index
    %21 = vector.load %arg7[%c0_14, %c0_15] : memref<1x32xf32, #tpu.memory_space<vmem>>, vector<1x32xf32>
    %22 = vector.broadcast %21 : vector<1x32xf32> to vector<16x32xf32>
    %23 = arith.addf %20, %22 : vector<16x32xf32>
    %c0_16 = arith.constant 0 : index
    %c0_17 = arith.constant 0 : index
    %24 = vector.load %arg8[%c0_16, %c0_17] : memref<16x32xf32, #tpu.memory_space<vmem>>, vector<16x32xf32>
    tpu.vector_store %arg8[%c0_16, %c0_17], %23 {strides = array<i32>} : memref<16x32xf32, #tpu.memory_space<vmem>>, vector<16x32xf32>,
    %c0_18 = arith.constant 0 : index
    %c0_19 = arith.constant 0 : index
    %25 = vector.load %arg9[%c0_18, %c0_19] : memref<1x32xf32, #tpu.memory_space<vmem>>, vector<1x32xf32>
    %cst_20 = arith.constant dense<0.000000e+00> : vector<32xf32>
    %26 = vector.multi_reduction <add>, %23, %cst_20 [0] : vector<16x32xf32> to vector<32xf32>
    %27 = vector.shape_cast %26 : vector<32xf32> to vector<1x32xf32>
    %28 = arith.addf %25, %27 : vector<1x32xf32>
    %c0_21 = arith.constant 0 : index
    %c0_22 = arith.constant 0 : index
    %29 = vector.load %arg9[%c0_21, %c0_22] : memref<1x32xf32, #tpu.memory_space<vmem>>, vector<1x32xf32>
    tpu.vector_store %arg9[%c0_21, %c0_22], %28 {strides = array<i32>} : memref<1x32xf32, #tpu.memory_space<vmem>>, vector<1x32xf32>,
    %c0_23 = arith.constant 0 : index
    %c0_24 = arith.constant 0 : index
    %30 = vector.load %arg10[%c0_23, %c0_24] : memref<1x32xf32, #tpu.memory_space<vmem>>, vector<1x32xf32>
    %31 = arith.mulf %23, %23 : vector<16x32xf32>
    %cst_25 = arith.constant dense<0.000000e+00> : vector<32xf32>
    %32 = vector.multi_reduction <add>, %31, %cst_25 [0] : vector<16x32xf32> to vector<32xf32>
    %33 = vector.shape_cast %32 : vector<32xf32> to vector<1x32xf32>
    %34 = arith.addf %30, %33 : vector<1x32xf32>
    %c0_26 = arith.constant 0 : index
    %c0_27 = arith.constant 0 : index
    %35 = vector.load %arg10[%c0_26, %c0_27] : memref<1x32xf32, #tpu.memory_space<vmem>>, vector<1x32xf32>
    tpu.vector_store %arg10[%c0_26, %c0_27], %34 {strides = array<i32>} : memref<1x32xf32, #tpu.memory_space<vmem>>, vector<1x32xf32>,
    return
  }
  func.func @transform_0(%arg0: i32) -> (i32, i32) {
    %c0_i32 = arith.constant 0 : i32
    %c0_i32_0 = arith.constant 0 : i32
    return %arg0, %c0_i32 : i32, i32
  }
  func.func @transform_1(%arg0: i32) -> (i32, i32) {
    %c0_i32 = arith.constant 0 : i32
    %c0_i32_0 = arith.constant 0 : i32
    %c0_i32_1 = arith.constant 0 : i32
    return %c0_i32, %c0_i32_0 : i32, i32
  }
  func.func @transform_2(%arg0: i32) -> (i32, i32) {
    %c0_i32 = arith.constant 0 : i32
    %c0_i32_0 = arith.constant 0 : i32
    %c0_i32_1 = arith.constant 0 : i32
    return %c0_i32, %c0_i32_0 : i32, i32
  }
  func.func @transform_3(%arg0: i32) -> (i32, i32) {
    %c0_i32 = arith.constant 0 : i32
    %c0_i32_0 = arith.constant 0 : i32
    %c0_i32_1 = arith.constant 0 : i32
    return %c0_i32, %c0_i32_0 : i32, i32
  }
  func.func @transform_4(%arg0: i32) -> (i32, i32) {
    %c0_i32 = arith.constant 0 : i32
    %c0_i32_0 = arith.constant 0 : i32
    %c0_i32_1 = arith.constant 0 : i32
    return %c0_i32, %c0_i32_0 : i32, i32
  }
  func.func @transform_5(%arg0: i32) -> (i32, i32) {
    %c0_i32 = arith.constant 0 : i32
    %c0_i32_0 = arith.constant 0 : i32
    %c0_i32_1 = arith.constant 0 : i32
    return %c0_i32, %c0_i32_0 : i32, i32
  }
  func.func @transform_6(%arg0: i32) -> (i32, i32) {
    %c0_i32 = arith.constant 0 : i32
    %c0_i32_0 = arith.constant 0 : i32
    %c0_i32_1 = arith.constant 0 : i32
    return %c0_i32, %c0_i32_0 : i32, i32
  }
  func.func @transform_7(%arg0: i32) -> (i32, i32) {
    %c0_i32 = arith.constant 0 : i32
    %c0_i32_0 = arith.constant 0 : i32
    return %arg0, %c0_i32 : i32, i32
  }
  func.func @transform_8(%arg0: i32) -> (i32, i32) {
    %c0_i32 = arith.constant 0 : i32
    %c0_i32_0 = arith.constant 0 : i32
    %c0_i32_1 = arith.constant 0 : i32
    return %c0_i32, %c0_i32_0 : i32, i32
  }
  func.func @transform_9(%arg0: i32) -> (i32, i32) {
    %c0_i32 = arith.constant 0 : i32
    %c0_i32_0 = arith.constant 0 : i32
    %c0_i32_1 = arith.constant 0 : i32
    return %c0_i32, %c0_i32_0 : i32, i32
  }
}

module attributes {stable_mosaic.version = 11 : i64} {
  func.func @bn_apply_kernel(%arg0: i32, %arg1: memref<16x32xf32, #tpu.memory_space<vmem>>, %arg2: memref<1x32xf32, #tpu.memory_space<vmem>>, %arg3: memref<1x32xf32, #tpu.memory_space<vmem>>, %arg4: memref<16x32xf32, #tpu.memory_space<vmem>>) attributes {dimension_semantics = [#tpu.dimension_semantics<parallel>], iteration_bounds = array<i64: 1>, scalar_prefetch = 0 : i64, scratch_operands = 0 : i64, tpu.core_type = #tpu.core_type<tc>, window_params = [{transform_indices = @transform_0, window_bounds = array<i64: 16, 32>}, {pipeline_mode = #tpu.pipeline_mode<synchronous>, transform_indices = @transform_1, window_bounds = array<i64: 1, 32>}, {pipeline_mode = #tpu.pipeline_mode<synchronous>, transform_indices = @transform_2, window_bounds = array<i64: 1, 32>}, {transform_indices = @transform_3, window_bounds = array<i64: 16, 32>}]} {
    %c0 = arith.constant 0 : index
    %c0_0 = arith.constant 0 : index
    %0 = vector.load %arg1[%c0, %c0_0] : memref<16x32xf32, #tpu.memory_space<vmem>>, vector<16x32xf32>
    %c0_1 = arith.constant 0 : index
    %c0_2 = arith.constant 0 : index
    %1 = vector.load %arg2[%c0_1, %c0_2] : memref<1x32xf32, #tpu.memory_space<vmem>>, vector<1x32xf32>
    %2 = vector.broadcast %1 : vector<1x32xf32> to vector<16x32xf32>
    %3 = arith.mulf %0, %2 : vector<16x32xf32>
    %c0_3 = arith.constant 0 : index
    %c0_4 = arith.constant 0 : index
    %4 = vector.load %arg3[%c0_3, %c0_4] : memref<1x32xf32, #tpu.memory_space<vmem>>, vector<1x32xf32>
    %5 = vector.broadcast %4 : vector<1x32xf32> to vector<16x32xf32>
    %6 = arith.addf %3, %5 : vector<16x32xf32>
    %c0_5 = arith.constant 0 : index
    %c0_6 = arith.constant 0 : index
    %7 = vector.load %arg4[%c0_5, %c0_6] : memref<16x32xf32, #tpu.memory_space<vmem>>, vector<16x32xf32>
    tpu.vector_store %arg4[%c0_5, %c0_6], %6 {strides = array<i32>} : memref<16x32xf32, #tpu.memory_space<vmem>>, vector<16x32xf32>,
    return
  }
  func.func @transform_0(%arg0: i32) -> (i32, i32) {
    %c0_i32 = arith.constant 0 : i32
    %c0_i32_0 = arith.constant 0 : i32
    return %arg0, %c0_i32 : i32, i32
  }
  func.func @transform_1(%arg0: i32) -> (i32, i32) {
    %c0_i32 = arith.constant 0 : i32
    %c0_i32_0 = arith.constant 0 : i32
    %c0_i32_1 = arith.constant 0 : i32
    return %c0_i32, %c0_i32_0 : i32, i32
  }
  func.func @transform_2(%arg0: i32) -> (i32, i32) {
    %c0_i32 = arith.constant 0 : i32
    %c0_i32_0 = arith.constant 0 : i32
    %c0_i32_1 = arith.constant 0 : i32
    return %c0_i32, %c0_i32_0 : i32, i32
  }
  func.func @transform_3(%arg0: i32) -> (i32, i32) {
    %c0_i32 = arith.constant 0 : i32
    %c0_i32_0 = arith.constant 0 : i32
    return %arg0, %c0_i32 : i32, i32
  }
}

</mosaic_0001>

<llo_original>
// kernel: mha_layer_forward.5
$region0: #{mha_layer_forward.5}
  #allocation0 [shape = 'u32[]', space=smem, size = 0x4, offset = 0x4, fixed_abs, tag = 'smem constant byte address 0x4 - core index']
  #allocation1 [shape = 'u32[144,128]{1,0:T(1,128)}', space=vmem, size = 0x12000, scoped, tag = 'internal scratch']
  %s0 = inlined_call_operand.vmem [shape: f32[16,32], index: 0, kind: input, shape index: {}]
  %s1 = inlined_call_operand.vmem [shape: f32[1,32], index: 1, kind: output, shape index: {0}]
  %s2 = inlined_call_operand.vmem [shape: f32[1,32], index: 2, kind: output, shape index: {1}]
  %3 = xla_tuple %s1, %s2
  %s4 = sld [smem:[#allocation0]]
  $region26: #{mha_layer_forward.5} parent=0
    _
  %s6 = ssub.s32 1, %s4
  %s7 = scalar_select 0, %s6, %s4
  // Predicated region
  $region2: #{mha_layer_forward.5} parent=0 // pred_check
    _
  $region3: #{mha_layer_forward.5} parent=0 // pred_check_branch
    %9 = sbr.rel (0) target = $region5
  $region4: #{mha_layer_forward.5} parent=0 // pred_region
    _
  $region5: #{mha_layer_forward.5} parent=0 // pred_fallthru
    _
  %p10 = scmp.eq.s32.totalorder 0, 0
  // Predicated region
  $region6: #{mha_layer_forward.5} parent=0 // pred_check
    %p11 = pneg %p10
  $region7: #{mha_layer_forward.5} parent=0 // pred_check_branch
    %13 = sbr.rel (%p11) target = $region9
  $region8: #{mha_layer_forward.5} parent=0 // pred_region
    %vm14 = vcmask 253952
    %15 = vst.msk [vmem:[%s1] sm:$0x1] %vm14, 0.0
    %16 = vst.msk [vmem:[%s2] sm:$0x1] %vm14, 0.0
  $region9: #{mha_layer_forward.5} parent=0 // pred_fallthru
    _
  %v17 = vld [vmem:[%s0] sm:$0xff]
  %v18 = vld [vmem:[%s0 + $0x8] sm:$0xff]
  %v19 = vld [vmem:[%s1] sm:$0x1]
  %vm20 = vcmask 261120
  %v21 = vsel %vm20, %v17, 0.0
  %v22 = vsel %vm20, %v18, 0.0
  %v23 = vadd.f32 %v21, %v22
  %v24 = vrot.slane %v23, 4
  %v25 = vadd.f32 %v23, %v24
  %v26 = vrot.slane %v25, 2
  %v27 = vadd.f32 %v25, %v26
  %v28 = vrot.slane %v27, 1
  %v29 = vadd.f32 %v27, %v28
  %v30 = vadd.f32 %v19, %v29
  %vm31 = vcmask 253952
  %32 = vst.msk [vmem:[%s1] sm:$0x1] %vm31, %v30
  %v33 = vld [vmem:[%s2] sm:$0x1]
  %v34 = vmul.f32 %v17, %v17
  %v35 = vmul.f32 %v18, %v18
  %v36 = vsel %vm20, %v34, 0.0
  %v37 = vsel %vm20, %v35, 0.0
  %v38 = vadd.f32 %v36, %v37
  %v39 = vrot.slane %v38, 4
  %v40 = vadd.f32 %v38, %v39
  %v41 = vrot.slane %v40, 2
  %v42 = vadd.f32 %v40, %v41
  %v43 = vrot.slane %v42, 1
  %v44 = vadd.f32 %v42, %v43
  %v45 = vadd.f32 %v33, %v44
  %46 = vst.msk [vmem:[%s2] sm:$0x1] %vm31, %v45
  // Predicated region
  $region10: #{mha_layer_forward.5} parent=0 // pred_check
    _
  $region11: #{mha_layer_forward.5} parent=0 // pred_check_branch
    %48 = sbr.rel (0) target = $region13
  $region12: #{mha_layer_forward.5} parent=0 // pred_region
    _
  $region13: #{mha_layer_forward.5} parent=0 // pred_fallthru
    _
  // Predicated region
  $region14: #{mha_layer_forward.5} parent=0 // pred_check
    _
  $region15: #{mha_layer_forward.5} parent=0 // pred_check_branch
    %50 = sbr.rel (0) target = $region17
  $region16: #{mha_layer_forward.5} parent=0 // pred_region
    _
  $region17: #{mha_layer_forward.5} parent=0 // pred_fallthru
    _
  // Predicated region
  $region18: #{mha_layer_forward.5} parent=0 // pred_check
    _
  $region19: #{mha_layer_forward.5} parent=0 // pred_check_branch
    %52 = sbr.rel (0) target = $region21
  $region20: #{mha_layer_forward.5} parent=0 // pred_region
    _
  $region21: #{mha_layer_forward.5} parent=0 // pred_fallthru
    _
  // Predicated region
  $region22: #{mha_layer_forward.5} parent=0 // pred_check
    _
  $region23: #{mha_layer_forward.5} parent=0 // pred_check_branch
    %54 = sbr.rel (0) target = $region25
  $region24: #{mha_layer_forward.5} parent=0 // pred_region
    _
  $region25: #{mha_layer_forward.5} parent=0 // pred_fallthru
    _

// kernel: mha_layer_forward.7
$region0: #{mha_layer_forward.7}
  #allocation0 [shape = 'u32[]', space=smem, size = 0x4, offset = 0x4, fixed_abs, tag = 'smem constant byte address 0x4 - core index']
  #allocation1 [shape = 'u32[144,128]{1,0:T(1,128)}', space=vmem, size = 0x12000, scoped, tag = 'internal scratch']
  %s0 = inlined_call_operand.vmem [shape: f32[16,32], index: 0, kind: input, shape index: {}]
  %s1 = inlined_call_operand.vmem [shape: f32[1,32], index: 1, kind: input, shape index: {}]
  %s2 = inlined_call_operand.vmem [shape: f32[1,32], index: 2, kind: input, shape index: {}]
  %s3 = inlined_call_operand.hbm [shape: f32[16,32], index: 3, kind: output, shape index: {}]
  %s4 = sld [smem:[#allocation0]]
  $region22: #{mha_layer_forward.7} parent=0
    _
  %s6 = ssub.s32 1, %s4
  %s7 = scalar_select 0, %s6, %s4
  $region1: #{mha_layer_forward.7} parent=0
    #allocation2 [shape = 'u8[8192]{0}', space=vmem, size = 0x2000, scoped, tag = 'output window, operand 0, single buffered']
    #allocation3 [shape = 's32[1]{0}', space=sflag, size = 0x4, scoped, tag = 'scoped memory for mha_layer_forward.7']
    %8 = vsyncpa [#allocation3], 0
    // Predicated region
    $region2: #{mha_layer_forward.7} parent=1 // pred_check
      _
    $region3: #{mha_layer_forward.7} parent=1 // pred_check_branch
      %10 = sbr.rel (0) target = $region5
    $region4: #{mha_layer_forward.7} parent=1 // pred_region
      _
    $region5: #{mha_layer_forward.7} parent=1 // pred_fallthru
      _
    // Predicated region
    $region6: #{mha_layer_forward.7} parent=1 // pred_check
      _
    $region7: #{mha_layer_forward.7} parent=1 // pred_check_branch
      %12 = sbr.rel (0) target = $region9
    $region8: #{mha_layer_forward.7} parent=1 // pred_region
      _
    $region9: #{mha_layer_forward.7} parent=1 // pred_fallthru
      _
    // Predicated region
    $region10: #{mha_layer_forward.7} parent=1 // pred_check
      _
    $region11: #{mha_layer_forward.7} parent=1 // pred_check_branch
      %14 = sbr.rel (0) target = $region13
    $region12: #{mha_layer_forward.7} parent=1 // pred_region
      _
    $region13: #{mha_layer_forward.7} parent=1 // pred_fallthru
      _
    %v15 = vld [vmem:[%s0] sm:$0xff]
    %v16 = vld [vmem:[%s0 + $0x8] sm:$0xff]
    %v17 = vld [vmem:[%s1] sm:$0x1]
    %v19 = vlaneseq
    %v20 = vshrl.u32 %v19, 7
    %v21 = vsub.s32 0, %v20
    %v22 = vrot.slane %v17, %v21
    %v24 = vmul.f32 %v15, %v22
    %v25 = vmul.f32 %v16, %v22
    %v26 = vld [vmem:[%s2] sm:$0x1]
    %v28 = vlaneseq
    %v29 = vshrl.u32 %v28, 7
    %v30 = vsub.s32 0, %v29
    %v31 = vrot.slane %v26, %v30
    %v33 = vadd.f32 %v24, %v31
    %v34 = vadd.f32 %v25, %v31
    %vm35 = vcmask 261120
    %36 = vst.msk [vmem:[#allocation2] sm:$0xff] %vm35, %v33
    %37 = vst.msk [vmem:[#allocation2 + $0x8] sm:$0xff] %vm35, %v34
    // Predicated region
    $region14: #{mha_layer_forward.7} parent=1 // pred_check
      _
    $region15: #{mha_layer_forward.7} parent=1 // pred_check_branch
      %39 = sbr.rel (0) target = $region17
    $region16: #{mha_layer_forward.7} parent=1 // pred_region
      %s41 = ssub.s32 256, 256
      %42 = vsyncadd [#allocation3], %s41
      %s43 = sshll.u32 [#allocation2], 4
      %s44 = int_to_ptr.vmem [resolvable:$true] %s43
      %49 = dma.vmem_to_hbm [thread:$0]  %s44, 256, %s3, [#allocation3], 128, 128, 8
    $region17: #{mha_layer_forward.7} parent=1 // pred_fallthru
      _
    // Predicated region
    $region18: #{mha_layer_forward.7} parent=1 // pred_check
      _
    $region19: #{mha_layer_forward.7} parent=1 // pred_check_branch
      %51 = sbr.rel (0) target = $region21
    $region20: #{mha_layer_forward.7} parent=1 // pred_region
      %52 = dma.done [#allocation3], 256
    $region21: #{mha_layer_forward.7} parent=1 // pred_fallthru
      _
    %53 = vsyncpa [#allocation3], 1

// kernel: mha_layer_forward.6
$region0: #{mha_layer_forward.6}
  #allocation0 [shape = 'u32[]', space=smem, size = 0x4, offset = 0x4, fixed_abs, tag = 'smem constant byte address 0x4 - core index']
  #allocation1 [shape = 'u32[144,128]{1,0:T(1,128)}', space=vmem, size = 0x12000, scoped, tag = 'internal scratch']
  %s0 = inlined_call_operand.vmem [shape: f32[16,32], index: 0, kind: input, shape index: {}]
  %s1 = inlined_call_operand.vmem [shape: f32[1,32], index: 1, kind: input, shape index: {}]
  %s2 = inlined_call_operand.vmem [shape: f32[1,32], index: 2, kind: input, shape index: {}]
  %s3 = inlined_call_operand.vmem [shape: bf16[32,64], index: 3, kind: input, shape index: {}]
  %s4 = inlined_call_operand.vmem [shape: f32[1,64], index: 4, kind: input, shape index: {}]
  %s5 = inlined_call_operand.vmem [shape: bf16[64,32], index: 5, kind: input, shape index: {}]
  %s6 = inlined_call_operand.vmem [shape: f32[1,32], index: 6, kind: input, shape index: {}]
  %s7 = inlined_call_operand.vmem [shape: f32[16,32], index: 7, kind: output, shape index: {0}]
  %s8 = inlined_call_operand.vmem [shape: f32[1,32], index: 8, kind: output, shape index: {1}]
  %s9 = inlined_call_operand.vmem [shape: f32[1,32], index: 9, kind: output, shape index: {2}]
  %10 = xla_tuple %s7, %s8, %s9
  %s11 = sld [smem:[#allocation0]]
  $region58: #{mha_layer_forward.6} parent=0
    _
  %s13 = ssub.s32 1, %s11
  %s14 = scalar_select 0, %s13, %s11
  // Predicated region
  $region2: #{mha_layer_forward.6} parent=0 // pred_check
    _
  $region3: #{mha_layer_forward.6} parent=0 // pred_check_branch
    %16 = sbr.rel (0) target = $region5
  $region4: #{mha_layer_forward.6} parent=0 // pred_region
    _
  $region5: #{mha_layer_forward.6} parent=0 // pred_fallthru
    _
  // Predicated region
  $region6: #{mha_layer_forward.6} parent=0 // pred_check
    _
  $region7: #{mha_layer_forward.6} parent=0 // pred_check_branch
    %18 = sbr.rel (0) target = $region9
  $region8: #{mha_layer_forward.6} parent=0 // pred_region
    _
  $region9: #{mha_layer_forward.6} parent=0 // pred_fallthru
    _
  // Predicated region
  $region10: #{mha_layer_forward.6} parent=0 // pred_check
    _
  $region11: #{mha_layer_forward.6} parent=0 // pred_check_branch
    %20 = sbr.rel (0) target = $region13
  $region12: #{mha_layer_forward.6} parent=0 // pred_region
    _
  $region13: #{mha_layer_forward.6} parent=0 // pred_fallthru
    _
  // Predicated region
  $region14: #{mha_layer_forward.6} parent=0 // pred_check
    _
  $region15: #{mha_layer_forward.6} parent=0 // pred_check_branch
    %22 = sbr.rel (0) target = $region17
  $region16: #{mha_layer_forward.6} parent=0 // pred_region
    _
  $region17: #{mha_layer_forward.6} parent=0 // pred_fallthru
    _
  // Predicated region
  $region18: #{mha_layer_forward.6} parent=0 // pred_check
    _
  $region19: #{mha_layer_forward.6} parent=0 // pred_check_branch
    %24 = sbr.rel (0) target = $region21
  $region20: #{mha_layer_forward.6} parent=0 // pred_region
    _
  $region21: #{mha_layer_forward.6} parent=0 // pred_fallthru
    _
  // Predicated region
  $region22: #{mha_layer_forward.6} parent=0 // pred_check
    _
  $region23: #{mha_layer_forward.6} parent=0 // pred_check_branch
    %26 = sbr.rel (0) target = $region25
  $region24: #{mha_layer_forward.6} parent=0 // pred_region
    _
  $region25: #{mha_layer_forward.6} parent=0 // pred_fallthru
    _
  // Predicated region
  $region26: #{mha_layer_forward.6} parent=0 // pred_check
    _
  $region27: #{mha_layer_forward.6} parent=0 // pred_check_branch
    %28 = sbr.rel (0) target = $region29
  $region28: #{mha_layer_forward.6} parent=0 // pred_region
    _
  $region29: #{mha_layer_forward.6} parent=0 // pred_fallthru
    _
  %p30 = scmp.eq.s32.totalorder 0, 0
  // Predicated region
  $region30: #{mha_layer_forward.6} parent=0 // pred_check
    %p31 = pneg %p30
  $region31: #{mha_layer_forward.6} parent=0 // pred_check_branch
    %33 = sbr.rel (%p31) target = $region33
  $region32: #{mha_layer_forward.6} parent=0 // pred_region
    %vm34 = vcmask 253952
    %35 = vst.msk [vmem:[%s8] sm:$0x1] %vm34, 0.0
    %36 = vst.msk [vmem:[%s9] sm:$0x1] %vm34, 0.0
  $region33: #{mha_layer_forward.6} parent=0 // pred_fallthru
    _
  %v37 = vld [vmem:[%s0] sm:$0xff]
  %v38 = vld [vmem:[%s0 + $0x8] sm:$0xff]
  %v39 = vld [vmem:[%s1] sm:$0x1]
  %v41 = vlaneseq
  %v42 = vshrl.u32 %v41, 7
  %v43 = vsub.s32 0, %v42
  %v44 = vrot.slane %v39, %v43
  %v46 = vmul.f32 %v37, %v44
  %v47 = vmul.f32 %v38, %v44
  %v48 = vld [vmem:[%s2] sm:$0x1]
  %v50 = vlaneseq
  %v51 = vshrl.u32 %v50, 7
  %v52 = vsub.s32 0, %v51
  %v53 = vrot.slane %v48, %v52
  %v55 = vadd.f32 %v46, %v53
  %v56 = vadd.f32 %v47, %v53
  %v57 = vpack.c.bf16 %v56, %v55
  %v58 = vld [vmem:[%s3] sm:$0xf]
  %v59 = vld [vmem:[%s3 + $0x4] sm:$0xf]
  %v60 = vld [vmem:[%s3 + $0x8] sm:$0xf]
  %v61 = vld [vmem:[%s3 + $0xc] sm:$0xf]
  %v62 = vld [vmem:[%s4] sm:$0x1]
  %v64 = vlaneseq
  %v65 = vshrl.u32 %v64, 7
  %v66 = vsub.s32 0, %v65
  %v67 = vrot.slane %v62, %v66
  %v73 = vunpack.c.l.b16 %v58
  %v74 = vunpack.c.l.b16 %v59
  %v75 = vunpack.c.l.b16 %v60
  %v76 = vunpack.c.l.b16 %v61
  %v77 = vpack.c.b16 %v74, %v73
  %v78 = vpack.c.b16 %v76, %v75
  %vm81 = vcmask 261120
  %v83 = vsel %vm81, %v57, 0
  %85 = vmatprep.subr.bf16.mxu0 0
  %86 = vmatpush1.bf16.msra.mxu0 %v77
  %87 = vmatprep.subr.bf16.mxu0 0
  %88 = vmatpush1.bf16.msra.mxu0 %v78
  %89 = vmatprep.subr.bf16.mxu0 0
  %90 = vmatpush1.bf16.msra.mxu0 0
  %91 = vmatprep.subr.bf16.mxu0 0
  %92 = vmatpush1.bf16.msra.mxu0 0
  %93 = vmatprep.subr.bf16.mxu0 0
  %94 = vmatpush1.bf16.msra.mxu0 0
  %95 = vmatprep.subr.bf16.mxu0 0
  %96 = vmatpush1.bf16.msra.mxu0 0
  %97 = vmatprep.subr.bf16.mxu0 0
  %98 = vmatpush1.bf16.msra.mxu0 0
  %99 = vmatprep.subr.bf16.mxu0 0
  %100 = vmatpush1.bf16.msra.mxu0 0
  %101 = vmatprep.subr.bf16.mxu0 0
  %102 = vmatpush1.bf16.msra.mxu0 0
  %103 = vmatprep.subr.bf16.mxu0 0
  %104 = vmatpush1.bf16.msra.mxu0 0
  %105 = vmatprep.subr.bf16.mxu0 0
  %106 = vmatpush1.bf16.msra.mxu0 0
  %107 = vmatprep.subr.bf16.mxu0 0
  %108 = vmatpush1.bf16.msra.mxu0 0
  %109 = vmatprep.subr.bf16.mxu0 0
  %110 = vmatpush1.bf16.msra.mxu0 0
  %111 = vmatprep.subr.bf16.mxu0 0
  %112 = vmatpush1.bf16.msra.mxu0 0
  %113 = vmatprep.subr.bf16.mxu0 0
  %114 = vmatpush1.bf16.msra.mxu0 0
  %115 = vmatprep.subr.bf16.mxu0 0
  %116 = vmatpush1.bf16.msra.mxu0 0
  %117 = vmatprep.mubr.bf16.mxu0 0
  %118 = vmatmul.mubr.bf16.gmra.mrb[0].mxu0 %v83
  %v119 = vpop.f32.mrb[0].mxu0
  %v120 = vadd.f32 %v67, %v119
  %v121 = vpop.f32.mrb[0].mxu0
  %v122 = vpop.f32.mrb[0].mxu0
  %v123 = vadd.f32 %v67, %v122
  %v124 = vpop.f32.mrb[0].mxu0
  %125 = vdwg.mxu0
  %v126 = vmax.f32 %v120, 0.0
  %v127 = vmax.f32 %v123, 0.0
  %v128 = vpack.c.bf16 %v127, %v126
  %v129 = vld [vmem:[%s5] sm:$0xf]
  %v130 = vld [vmem:[%s5 + $0x4] sm:$0xf]
  %v131 = vld [vmem:[%s5 + $0x8] sm:$0xf]
  %v132 = vld [vmem:[%s5 + $0xc] sm:$0xf]
  %v133 = vld [vmem:[%s5 + $0x10] sm:$0xf]
  %v134 = vld [vmem:[%s5 + $0x14] sm:$0xf]
  %v135 = vld [vmem:[%s5 + $0x18] sm:$0xf]
  %v136 = vld [vmem:[%s5 + $0x1c] sm:$0xf]
  %v137 = vld [vmem:[%s6] sm:$0x1]
  %v139 = vlaneseq
  %v140 = vshrl.u32 %v139, 7
  %v141 = vsub.s32 0, %v140
  %v142 = vrot.slane %v137, %v141
  %v152 = vunpack.c.l.b16 %v129
  %v153 = vunpack.c.l.b16 %v130
  %v154 = vunpack.c.l.b16 %v131
  %v155 = vunpack.c.l.b16 %v132
  %v156 = vunpack.c.l.b16 %v133
  %v157 = vunpack.c.l.b16 %v134
  %v158 = vunpack.c.l.b16 %v135
  %v159 = vunpack.c.l.b16 %v136
  %v160 = vpack.c.b16 %v153, %v152
  %v161 = vpack.c.b16 %v155, %v154
  %v162 = vpack.c.b16 %v157, %v156
  %v163 = vpack.c.b16 %v159, %v158
  %vm168 = vcmask 523264
  %v170 = vsel %vm168, %v128, 0
  %172 = vmatprep.subr.bf16.mxu0 0
  %173 = vmatpush1.bf16.msra.mxu0 %v160
  %174 = vmatprep.subr.bf16.mxu0 0
  %175 = vmatpush1.bf16.msra.mxu0 %v161
  %176 = vmatprep.subr.bf16.mxu0 0
  %177 = vmatpush1.bf16.msra.mxu0 %v162
  %178 = vmatprep.subr.bf16.mxu0 0
  %179 = vmatpush1.bf16.msra.mxu0 %v163
  %180 = vmatprep.subr.bf16.mxu0 0
  %181 = vmatpush1.bf16.msra.mxu0 0
  %182 = vmatprep.subr.bf16.mxu0 0
  %183 = vmatpush1.bf16.msra.mxu0 0
  %184 = vmatprep.subr.bf16.mxu0 0
  %185 = vmatpush1.bf16.msra.mxu0 0
  %186 = vmatprep.subr.bf16.mxu0 0
  %187 = vmatpush1.bf16.msra.mxu0 0
  %188 = vmatprep.subr.bf16.mxu0 0
  %189 = vmatpush1.bf16.msra.mxu0 0
  %190 = vmatprep.subr.bf16.mxu0 0
  %191 = vmatpush1.bf16.msra.mxu0 0
  %192 = vmatprep.subr.bf16.mxu0 0
  %193 = vmatpush1.bf16.msra.mxu0 0
  %194 = vmatprep.subr.bf16.mxu0 0
  %195 = vmatpush1.bf16.msra.mxu0 0
  %196 = vmatprep.subr.bf16.mxu0 0
  %197 = vmatpush1.bf16.msra.mxu0 0
  %198 = vmatprep.subr.bf16.mxu0 0
  %199 = vmatpush1.bf16.msra.mxu0 0
  %200 = vmatprep.subr.bf16.mxu0 0
  %201 = vmatpush1.bf16.msra.mxu0 0
  %202 = vmatprep.subr.bf16.mxu0 0
  %203 = vmatpush1.bf16.msra.mxu0 0
  %204 = vmatprep.mubr.bf16.mxu0 0
  %205 = vmatmul.mubr.bf16.gmra.mrb[0].mxu0 %v170
  %v206 = vpop.f32.mrb[0].mxu0
  %v207 = vadd.f32 %v142, %v206
  %v208 = vpop.f32.mrb[0].mxu0
  %v209 = vpop.f32.mrb[0].mxu0
  %v210 = vadd.f32 %v142, %v209
  %v211 = vpop.f32.mrb[0].mxu0
  %212 = vdwg.mxu0
  %213 = vst.msk [vmem:[%s7] sm:$0xff] %vm81, %v207
  %214 = vst.msk [vmem:[%s7 + $0x8] sm:$0xff] %vm81, %v210
  %v215 = vld [vmem:[%s8] sm:$0x1]
  %v216 = vsel %vm81, %v207, 0.0
  %v217 = vsel %vm81, %v210, 0.0
  %v218 = vadd.f32 %v216, %v217
  %v219 = vrot.slane %v218, 4
  %v220 = vadd.f32 %v218, %v219
  %v221 = vrot.slane %v220, 2
  %v222 = vadd.f32 %v220, %v221
  %v223 = vrot.slane %v222, 1
  %v224 = vadd.f32 %v222, %v223
  %v225 = vadd.f32 %v215, %v224
  %vm226 = vcmask 253952
  %227 = vst.msk [vmem:[%s8] sm:$0x1] %vm226, %v225
  %v228 = vld [vmem:[%s9] sm:$0x1]
  %v229 = vmul.f32 %v207, %v207
  %v230 = vmul.f32 %v210, %v210
  %v231 = vsel %vm81, %v229, 0.0
  %v232 = vsel %vm81, %v230, 0.0
  %v233 = vadd.f32 %v231, %v232
  %v234 = vrot.slane %v233, 4
  %v235 = vadd.f32 %v233, %v234
  %v236 = vrot.slane %v235, 2
  %v237 = vadd.f32 %v235, %v236
  %v238 = vrot.slane %v237, 1
  %v239 = vadd.f32 %v237, %v238
  %v240 = vadd.f32 %v228, %v239
  %241 = vst.msk [vmem:[%s9] sm:$0x1] %vm226, %v240
  // Predicated region
  $region34: #{mha_layer_forward.6} parent=0 // pred_check
    _
  $region35: #{mha_layer_forward.6} parent=0 // pred_check_branch
    %243 = sbr.rel (0) target = $region37
  $region36: #{mha_layer_forward.6} parent=0 // pred_region
    _
  $region37: #{mha_layer_forward.6} parent=0 // pred_fallthru
    _
  // Predicated region
  $region38: #{mha_layer_forward.6} parent=0 // pred_check
    _
  $region39: #{mha_layer_forward.6} parent=0 // pred_check_branch
    %245 = sbr.rel (0) target = $region41
  $region40: #{mha_layer_forward.6} parent=0 // pred_region
    _
  $region41: #{mha_layer_forward.6} parent=0 // pred_fallthru
    _
  // Predicated region
  $region42: #{mha_layer_forward.6} parent=0 // pred_check
    _
  $region43: #{mha_layer_forward.6} parent=0 // pred_check_branch
    %247 = sbr.rel (0) target = $region45
  $region44: #{mha_layer_forward.6} parent=0 // pred_region
    _
  $region45: #{mha_layer_forward.6} parent=0 // pred_fallthru
    _
  // Predicated region
  $region46: #{mha_layer_forward.6} parent=0 // pred_check
    _
  $region47: #{mha_layer_forward.6} parent=0 // pred_check_branch
    %249 = sbr.rel (0) target = $region49
  $region48: #{mha_layer_forward.6} parent=0 // pred_region
    _
  $region49: #{mha_layer_forward.6} parent=0 // pred_fallthru
    _
  // Predicated region
  $region50: #{mha_layer_forward.6} parent=0 // pred_check
    _
  $region51: #{mha_layer_forward.6} parent=0 // pred_check_branch
    %251 = sbr.rel (0) target = $region53
  $region52: #{mha_layer_forward.6} parent=0 // pred_region
    _
  $region53: #{mha_layer_forward.6} parent=0 // pred_fallthru
    _
  // Predicated region
  $region54: #{mha_layer_forward.6} parent=0 // pred_check
    _
  $region55: #{mha_layer_forward.6} parent=0 // pred_check_branch
    %253 = sbr.rel (0) target = $region57
  $region56: #{mha_layer_forward.6} parent=0 // pred_region
    _
  $region57: #{mha_layer_forward.6} parent=0 // pred_fallthru
    _

// kernel: mha_layer_forward.4
$region0: #{mha_layer_forward.4}
  #allocation0 [shape = 'u32[]', space=smem, size = 0x4, offset = 0x4, fixed_abs, tag = 'smem constant byte address 0x4 - core index']
  #allocation1 [shape = 'u32[144,128]{1,0:T(1,128)}', space=vmem, size = 0x12000, scoped, tag = 'internal scratch']
  %s0 = inlined_call_operand.vmem [shape: f32[2,8,32], index: 0, kind: input, shape index: {}]
  %s1 = inlined_call_operand.vmem [shape: bf16[32,96], index: 1, kind: input, shape index: {}]
  %s2 = inlined_call_operand.vmem [shape: f32[32,32], index: 2, kind: input, shape index: {}]
  %s3 = inlined_call_operand.vmem [shape: f32[2,8,32], index: 3, kind: output, shape index: {}]
  %s4 = sld [smem:[#allocation0]]
  $region22: #{mha_layer_forward.4} parent=0
    _
  %s6 = ssub.s32 1, %s4
  %s7 = scalar_select 0, %s6, %s4
  // Predicated region
  $region2: #{mha_layer_forward.4} parent=0 // pred_check
    _
  $region3: #{mha_layer_forward.4} parent=0 // pred_check_branch
    %9 = sbr.rel (0) target = $region5
  $region4: #{mha_layer_forward.4} parent=0 // pred_region
    _
  $region5: #{mha_layer_forward.4} parent=0 // pred_fallthru
    _
  // Predicated region
  $region6: #{mha_layer_forward.4} parent=0 // pred_check
    _
  $region7: #{mha_layer_forward.4} parent=0 // pred_check_branch
    %11 = sbr.rel (0) target = $region9
  $region8: #{mha_layer_forward.4} parent=0 // pred_region
    _
  $region9: #{mha_layer_forward.4} parent=0 // pred_fallthru
    _
  // Predicated region
  $region10: #{mha_layer_forward.4} parent=0 // pred_check
    _
  $region11: #{mha_layer_forward.4} parent=0 // pred_check_branch
    %13 = sbr.rel (0) target = $region13
  $region12: #{mha_layer_forward.4} parent=0 // pred_region
    _
  $region13: #{mha_layer_forward.4} parent=0 // pred_fallthru
    _
  %v15 = vld [vmem:[%s0] sm:$0xff]
  %v16 = vld [vmem:[%s0 + $0x8] sm:$0xff]
  %v17 = vpack.c.bf16 %v16, %v15
  %v18 = vld [vmem:[%s1] sm:$0xf]
  %v19 = vld [vmem:[%s1 + $0x4] sm:$0xf]
  %v20 = vld [vmem:[%s1 + $0x8] sm:$0xf]
  %v21 = vld [vmem:[%s1 + $0xc] sm:$0xf]
  %v26 = vunpack.c.l.b16 %v18
  %v27 = vunpack.c.l.b16 %v19
  %v28 = vunpack.c.l.b16 %v20
  %v29 = vunpack.c.l.b16 %v21
  %v30 = vpack.c.b16 %v27, %v26
  %v31 = vpack.c.b16 %v29, %v28
  %vm34 = vcmask 261120
  %v36 = vsel %vm34, %v17, 0
  %38 = vmatprep.subr.bf16.mxu0 0
  %39 = vmatpush1.bf16.msra.mxu0 %v30
  %40 = vmatprep.subr.bf16.mxu0 0
  %41 = vmatpush1.bf16.msra.mxu0 %v31
  %42 = vmatprep.subr.bf16.mxu0 0
  %43 = vmatpush1.bf16.msra.mxu0 0
  %44 = vmatprep.subr.bf16.mxu0 0
  %45 = vmatpush1.bf16.msra.mxu0 0
  %46 = vmatprep.subr.bf16.mxu0 0
  %47 = vmatpush1.bf16.msra.mxu0 0
  %48 = vmatprep.subr.bf16.mxu0 0
  %49 = vmatpush1.bf16.msra.mxu0 0
  %50 = vmatprep.subr.bf16.mxu0 0
  %51 = vmatpush1.bf16.msra.mxu0 0
  %52 = vmatprep.subr.bf16.mxu0 0
  %53 = vmatpush1.bf16.msra.mxu0 0
  %54 = vmatprep.subr.bf16.mxu0 0
  %55 = vmatpush1.bf16.msra.mxu0 0
  %56 = vmatprep.subr.bf16.mxu0 0
  %57 = vmatpush1.bf16.msra.mxu0 0
  %58 = vmatprep.subr.bf16.mxu0 0
  %59 = vmatpush1.bf16.msra.mxu0 0
  %60 = vmatprep.subr.bf16.mxu0 0
  %61 = vmatpush1.bf16.msra.mxu0 0
  %62 = vmatprep.subr.bf16.mxu0 0
  %63 = vmatpush1.bf16.msra.mxu0 0
  %64 = vmatprep.subr.bf16.mxu0 0
  %65 = vmatpush1.bf16.msra.mxu0 0
  %66 = vmatprep.subr.bf16.mxu0 0
  %67 = vmatpush1.bf16.msra.mxu0 0
  %68 = vmatprep.subr.bf16.mxu0 0
  %69 = vmatpush1.bf16.msra.mxu0 0
  %70 = vmatprep.mubr.bf16.mxu0 0
  %71 = vmatmul.mubr.bf16.gmra.mrb[0].mxu0 %v36
  %v72 = vpop.f32.mrb[0].mxu0
  %v73 = vadd.f32 0.0, %v72
  %v74 = vpop.f32.mrb[0].mxu0
  %v75 = vpop.f32.mrb[0].mxu0
  %v76 = vadd.f32 0.0, %v75
  %v77 = vpop.f32.mrb[0].mxu0
  %78 = vdwg.mxu0
  %v79 = vld [vmem:[%s2] sm:$0xff]
  %v80 = vld [vmem:[%s2 + $0x8] sm:$0xff]
  %v81 = vld [vmem:[%s2 + $0x10] sm:$0xff]
  %v82 = vld [vmem:[%s2 + $0x18] sm:$0xff]
  %v83 = vpack.c.bf16 %v73, %v73
  %v84 = vpack.c.bf16 %v76, %v76
  %86 = vrot.lane.b32.xlu0 %v83, 96
  %v87 = vpop.permute.xlu0 %86
  %vm88 = vcmask 64512
  %v90 = vsel %vm88, %v83, 0
  %v93 = vsel %vm88, %v87, 0
  %95 = vmatprep.subr.bf16.mxu0 0
  %96 = vmatpush1.bf16.xpose.msra.mxu0 %v93
  %97 = vmatprep.subr.bf16.mxu0 0
  %98 = vmatpush1.bf16.xpose.msra.mxu0 0
  %99 = vmatprep.subr.bf16.mxu0 0
  %100 = vmatpush1.bf16.xpose.msra.mxu0 0
  %101 = vmatprep.subr.bf16.mxu0 0
  %102 = vmatpush1.bf16.xpose.msra.mxu0 0
  %103 = vmatprep.subr.bf16.mxu0 0
  %104 = vmatpush1.bf16.xpose.msra.mxu0 0
  %105 = vmatprep.subr.bf16.mxu0 0
  %106 = vmatpush1.bf16.xpose.msra.mxu0 0
  %107 = vmatprep.subr.bf16.mxu0 0
  %108 = vmatpush1.bf16.xpose.msra.mxu0 0
  %109 = vmatprep.subr.bf16.mxu0 0
  %110 = vmatpush1.bf16.xpose.msra.mxu0 0
  %111 = vmatprep.subr.bf16.mxu0 0
  %112 = vmatpush1.bf16.xpose.msra.mxu0 0
  %113 = vmatprep.subr.bf16.mxu0 0
  %114 = vmatpush1.bf16.xpose.msra.mxu0 0
  %115 = vmatprep.subr.bf16.mxu0 0
  %116 = vmatpush1.bf16.xpose.msra.mxu0 0
  %117 = vmatprep.subr.bf16.mxu0 0
  %118 = vmatpush1.bf16.xpose.msra.mxu0 0
  %119 = vmatprep.subr.bf16.mxu0 0
  %120 = vmatpush1.bf16.xpose.msra.mxu0 0
  %121 = vmatprep.subr.bf16.mxu0 0
  %122 = vmatpush1.bf16.xpose.msra.mxu0 0
  %123 = vmatprep.subr.bf16.mxu0 0
  %124 = vmatpush1.bf16.xpose.msra.mxu0 0
  %125 = vmatprep.subr.bf16.mxu0 0
  %126 = vmatpush1.bf16.xpose.msra.mxu0 0
  %127 = vmatprep.mubr.bf16.mxu0 0
  %128 = vmatmul.mubr.bf16.gmra.mrb[0].mxu0 %v90
  %v129 = vpop.f32.mrb[0].mxu0
  %v130 = vadd.f32 0.0, %v129
  %v131 = vpop.f32.mrb[0].mxu0
  %v132 = vpop.f32.mrb[0].mxu0
  %v133 = vpop.f32.mrb[0].mxu0
  %134 = vdwg.mxu0
  %136 = vrot.lane.b32.xlu0 %v84, 96
  %v137 = vpop.permute.xlu0 %136
  %v139 = vsel %vm88, %v84, 0
  %v142 = vsel %vm88, %v137, 0
  %144 = vmatprep.subr.bf16.mxu0 0
  %145 = vmatpush1.bf16.xpose.msra.mxu0 %v142
  %146 = vmatprep.subr.bf16.mxu0 0
  %147 = vmatpush1.bf16.xpose.msra.mxu0 0
  %148 = vmatprep.subr.bf16.mxu0 0
  %149 = vmatpush1.bf16.xpose.msra.mxu0 0
  %150 = vmatprep.subr.bf16.mxu0 0
  %151 = vmatpush1.bf16.xpose.msra.mxu0 0
  %152 = vmatprep.subr.bf16.mxu0 0
  %153 = vmatpush1.bf16.xpose.msra.mxu0 0
  %154 = vmatprep.subr.bf16.mxu0 0
  %155 = vmatpush1.bf16.xpose.msra.mxu0 0
  %156 = vmatprep.subr.bf16.mxu0 0
  %157 = vmatpush1.bf16.xpose.msra.mxu0 0
  %158 = vmatprep.subr.bf16.mxu0 0
  %159 = vmatpush1.bf16.xpose.msra.mxu0 0
  %160 = vmatprep.subr.bf16.mxu0 0
  %161 = vmatpush1.bf16.xpose.msra.mxu0 0
  %162 = vmatprep.subr.bf16.mxu0 0
  %163 = vmatpush1.bf16.xpose.msra.mxu0 0
  %164 = vmatprep.subr.bf16.mxu0 0
  %165 = vmatpush1.bf16.xpose.msra.mxu0 0
  %166 = vmatprep.subr.bf16.mxu0 0
  %167 = vmatpush1.bf16.xpose.msra.mxu0 0
  %168 = vmatprep.subr.bf16.mxu0 0
  %169 = vmatpush1.bf16.xpose.msra.mxu0 0
  %170 = vmatprep.subr.bf16.mxu0 0
  %171 = vmatpush1.bf16.xpose.msra.mxu0 0
  %172 = vmatprep.subr.bf16.mxu0 0
  %173 = vmatpush1.bf16.xpose.msra.mxu0 0
  %174 = vmatprep.subr.bf16.mxu0 0
  %175 = vmatpush1.bf16.xpose.msra.mxu0 0
  %176 = vmatprep.mubr.bf16.mxu0 0
  %177 = vmatmul.mubr.bf16.gmra.mrb[0].mxu0 %v139
  %v178 = vpop.f32.mrb[0].mxu0
  %v179 = vadd.f32 0.0, %v178
  %v180 = vpop.f32.mrb[0].mxu0
  %v181 = vpop.f32.mrb[0].mxu0
  %v182 = vpop.f32.mrb[0].mxu0
  %183 = vdwg.mxu0
  %v184 = vmul.f32 %v130, 0.35355338
  %v185 = vmul.f32 %v179, 0.35355338
  %v186 = vsel %vm88, %v184, -inf
  %187 = vmax.xlane.f32.xlu0 %v186
  %v188 = vpop.xlane.xlu0 %187
  %v189 = vsel %vm88, %v185, -inf
  %190 = vmax.xlane.f32.xlu0 %v189
  %v191 = vpop.xlane.xlu0 %190
  %v192 = vsub.f32 %v184, %v188
  %v193 = vsub.f32 %v185, %v191
  %v194 = vmul.f32 %v192, 1.442695
  %v195 = vpow.pop %v194
  %v196 = vmul.f32 %v193, 1.442695
  %v197 = vpow.pop %v196
  %v198 = vsel %vm88, %v195, 0.0
  %199 = vadd.xlane.f32.xlu0 %v198
  %v200 = vpop.xlane.xlu0 %199
  %v201 = vsel %vm88, %v197, 0.0
  %202 = vadd.xlane.f32.xlu0 %v201
  %v203 = vpop.xlane.xlu0 %202
  %v204 = vrcp.pop %v200
  %v205 = vmul.f32 %v195, %v204
  %v206 = vrcp.pop %v203
  %v207 = vmul.f32 %v197, %v206
  %v208 = vpack.c.bf16 %v205, %v205
  %v209 = vpack.c.bf16 %v207, %v207
  %210 = vrot.lane.b32.xlu0 %v83, 64
  %v211 = vpop.permute.xlu0 %210
  %v213 = vsel %vm88, %v208, 0
  %vm215 = vcmask 1043456
  %v217 = vsel %vm215, %v211, 0
  %219 = vmatprep.subr.bf16.mxu0 0
  %220 = vmatpush1.bf16.msra.mxu0 %v217
  %221 = vmatprep.subr.bf16.mxu0 0
  %222 = vmatpush1.bf16.msra.mxu0 0
  %223 = vmatprep.subr.bf16.mxu0 0
  %224 = vmatpush1.bf16.msra.mxu0 0
  %225 = vmatprep.subr.bf16.mxu0 0
  %226 = vmatpush1.bf16.msra.mxu0 0
  %227 = vmatprep.subr.bf16.mxu0 0
  %228 = vmatpush1.bf16.msra.mxu0 0
  %229 = vmatprep.subr.bf16.mxu0 0
  %230 = vmatpush1.bf16.msra.mxu0 0
  %231 = vmatprep.subr.bf16.mxu0 0
  %232 = vmatpush1.bf16.msra.mxu0 0
  %233 = vmatprep.subr.bf16.mxu0 0
  %234 = vmatpush1.bf16.msra.mxu0 0
  %235 = vmatprep.subr.bf16.mxu0 0
  %236 = vmatpush1.bf16.msra.mxu0 0
  %237 = vmatprep.subr.bf16.mxu0 0
  %238 = vmatpush1.bf16.msra.mxu0 0
  %239 = vmatprep.subr.bf16.mxu0 0
  %240 = vmatpush1.bf16.msra.mxu0 0
  %241 = vmatprep.subr.bf16.mxu0 0
  %242 = vmatpush1.bf16.msra.mxu0 0
  %243 = vmatprep.subr.bf16.mxu0 0
  %244 = vmatpush1.bf16.msra.mxu0 0
  %245 = vmatprep.subr.bf16.mxu0 0
  %246 = vmatpush1.bf16.msra.mxu0 0
  %247 = vmatprep.subr.bf16.mxu0 0
  %248 = vmatpush1.bf16.msra.mxu0 0
  %249 = vmatprep.subr.bf16.mxu0 0
  %250 = vmatpush1.bf16.msra.mxu0 0
  %251 = vmatprep.mubr.bf16.mxu0 0
  %252 = vmatmul.mubr.bf16.gmra.mrb[0].mxu0 %v213
  %v253 = vpop.f32.mrb[0].mxu0
  %v254 = vadd.f32 0.0, %v253
  %v255 = vpop.f32.mrb[0].mxu0
  %v256 = vpop.f32.mrb[0].mxu0
  %v257 = vpop.f32.mrb[0].mxu0
  %258 = vdwg.mxu0
  %259 = vrot.lane.b32.xlu0 %v84, 64
  %v260 = vpop.permute.xlu0 %259
  %v262 = vsel %vm88, %v209, 0
  %v265 = vsel %vm215, %v260, 0
  %267 = vmatprep.subr.bf16.mxu0 0
  %268 = vmatpush1.bf16.msra.mxu0 %v265
  %269 = vmatprep.subr.bf16.mxu0 0
  %270 = vmatpush1.bf16.msra.mxu0 0
  %271 = vmatprep.subr.bf16.mxu0 0
  %272 = vmatpush1.bf16.msra.mxu0 0
  %273 = vmatprep.subr.bf16.mxu0 0
  %274 = vmatpush1.bf16.msra.mxu0 0
  %275 = vmatprep.subr.bf16.mxu0 0
  %276 = vmatpush1.bf16.msra.mxu0 0
  %277 = vmatprep.subr.bf16.mxu0 0
  %278 = vmatpush1.bf16.msra.mxu0 0
  %279 = vmatprep.subr.bf16.mxu0 0
  %280 = vmatpush1.bf16.msra.mxu0 0
  %281 = vmatprep.subr.bf16.mxu0 0
  %282 = vmatpush1.bf16.msra.mxu0 0
  %283 = vmatprep.subr.bf16.mxu0 0
  %284 = vmatpush1.bf16.msra.mxu0 0
  %285 = vmatprep.subr.bf16.mxu0 0
  %286 = vmatpush1.bf16.msra.mxu0 0
  %287 = vmatprep.subr.bf16.mxu0 0
  %288 = vmatpush1.bf16.msra.mxu0 0
  %289 = vmatprep.subr.bf16.mxu0 0
  %290 = vmatpush1.bf16.msra.mxu0 0
  %291 = vmatprep.subr.bf16.mxu0 0
  %292 = vmatpush1.bf16.msra.mxu0 0
  %293 = vmatprep.subr.bf16.mxu0 0
  %294 = vmatpush1.bf16.msra.mxu0 0
  %295 = vmatprep.subr.bf16.mxu0 0
  %296 = vmatpush1.bf16.msra.mxu0 0
  %297 = vmatprep.subr.bf16.mxu0 0
  %298 = vmatpush1.bf16.msra.mxu0 0
  %299 = vmatprep.mubr.bf16.mxu0 0
  %300 = vmatmul.mubr.bf16.gmra.mrb[0].mxu0 %v262
  %v301 = vpop.f32.mrb[0].mxu0
  %v302 = vadd.f32 0.0, %v301
  %v303 = vpop.f32.mrb[0].mxu0
  %v304 = vpop.f32.mrb[0].mxu0
  %v305 = vpop.f32.mrb[0].mxu0
  %306 = vdwg.mxu0
  %v307 = vpack.c.bf16 %v302, %v254
  %v308 = vpack.c.bf16 %v79, %v79
  %309 = vrot.lane.b32.xlu0 %v83, 120
  %v310 = vpop.permute.xlu0 %309
  %311 = vrot.lane.b32.xlu0 %v83, 88
  %v312 = vpop.permute.xlu0 %311
  %v314 = vsel %vm88, %v310, 0
  %v317 = vsel %vm88, %v312, 0
  %319 = vmatprep.subr.bf16.mxu0 0
  %320 = vmatpush1.bf16.xpose.msra.mxu0 %v317
  %321 = vmatprep.subr.bf16.mxu0 0
  %322 = vmatpush1.bf16.xpose.msra.mxu0 0
  %323 = vmatprep.subr.bf16.mxu0 0
  %324 = vmatpush1.bf16.xpose.msra.mxu0 0
  %325 = vmatprep.subr.bf16.mxu0 0
  %326 = vmatpush1.bf16.xpose.msra.mxu0 0
  %327 = vmatprep.subr.bf16.mxu0 0
  %328 = vmatpush1.bf16.xpose.msra.mxu0 0
  %329 = vmatprep.subr.bf16.mxu0 0
  %330 = vmatpush1.bf16.xpose.msra.mxu0 0
  %331 = vmatprep.subr.bf16.mxu0 0
  %332 = vmatpush1.bf16.xpose.msra.mxu0 0
  %333 = vmatprep.subr.bf16.mxu0 0
  %334 = vmatpush1.bf16.xpose.msra.mxu0 0
  %335 = vmatprep.subr.bf16.mxu0 0
  %336 = vmatpush1.bf16.xpose.msra.mxu0 0
  %337 = vmatprep.subr.bf16.mxu0 0
  %338 = vmatpush1.bf16.xpose.msra.mxu0 0
  %339 = vmatprep.subr.bf16.mxu0 0
  %340 = vmatpush1.bf16.xpose.msra.mxu0 0
  %341 = vmatprep.subr.bf16.mxu0 0
  %342 = vmatpush1.bf16.xpose.msra.mxu0 0
  %343 = vmatprep.subr.bf16.mxu0 0
  %344 = vmatpush1.bf16.xpose.msra.mxu0 0
  %345 = vmatprep.subr.bf16.mxu0 0
  %346 = vmatpush1.bf16.xpose.msra.mxu0 0
  %347 = vmatprep.subr.bf16.mxu0 0
  %348 = vmatpush1.bf16.xpose.msra.mxu0 0
  %349 = vmatprep.subr.bf16.mxu0 0
  %350 = vmatpush1.bf16.xpose.msra.mxu0 0
  %351 = vmatprep.mubr.bf16.mxu0 0
  %352 = vmatmul.mubr.bf16.gmra.mrb[0].mxu0 %v314
  %v353 = vpop.f32.mrb[0].mxu0
  %v354 = vadd.f32 0.0, %v353
  %v355 = vpop.f32.mrb[0].mxu0
  %v356 = vpop.f32.mrb[0].mxu0
  %v357 = vpop.f32.mrb[0].mxu0
  %358 = vdwg.mxu0
  %359 = vrot.lane.b32.xlu0 %v84, 120
  %v360 = vpop.permute.xlu0 %359
  %361 = vrot.lane.b32.xlu0 %v84, 88
  %v362 = vpop.permute.xlu0 %361
  %v364 = vsel %vm88, %v360, 0
  %v367 = vsel %vm88, %v362, 0
  %369 = vmatprep.subr.bf16.mxu0 0
  %370 = vmatpush1.bf16.xpose.msra.mxu0 %v367
  %371 = vmatprep.subr.bf16.mxu0 0
  %372 = vmatpush1.bf16.xpose.msra.mxu0 0
  %373 = vmatprep.subr.bf16.mxu0 0
  %374 = vmatpush1.bf16.xpose.msra.mxu0 0
  %375 = vmatprep.subr.bf16.mxu0 0
  %376 = vmatpush1.bf16.xpose.msra.mxu0 0
  %377 = vmatprep.subr.bf16.mxu0 0
  %378 = vmatpush1.bf16.xpose.msra.mxu0 0
  %379 = vmatprep.subr.bf16.mxu0 0
  %380 = vmatpush1.bf16.xpose.msra.mxu0 0
  %381 = vmatprep.subr.bf16.mxu0 0
  %382 = vmatpush1.bf16.xpose.msra.mxu0 0
  %383 = vmatprep.subr.bf16.mxu0 0
  %384 = vmatpush1.bf16.xpose.msra.mxu0 0
  %385 = vmatprep.subr.bf16.mxu0 0
  %386 = vmatpush1.bf16.xpose.msra.mxu0 0
  %387 = vmatprep.subr.bf16.mxu0 0
  %388 = vmatpush1.bf16.xpose.msra.mxu0 0
  %389 = vmatprep.subr.bf16.mxu0 0
  %390 = vmatpush1.bf16.xpose.msra.mxu0 0
  %391 = vmatprep.subr.bf16.mxu0 0
  %392 = vmatpush1.bf16.xpose.msra.mxu0 0
  %393 = vmatprep.subr.bf16.mxu0 0
  %394 = vmatpush1.bf16.xpose.msra.mxu0 0
  %395 = vmatprep.subr.bf16.mxu0 0
  %396 = vmatpush1.bf16.xpose.msra.mxu0 0
  %397 = vmatprep.subr.bf16.mxu0 0
  %398 = vmatpush1.bf16.xpose.msra.mxu0 0
  %399 = vmatprep.subr.bf16.mxu0 0
  %400 = vmatpush1.bf16.xpose.msra.mxu0 0
  %401 = vmatprep.mubr.bf16.mxu0 0
  %402 = vmatmul.mubr.bf16.gmra.mrb[0].mxu0 %v364
  %v403 = vpop.f32.mrb[0].mxu0
  %v404 = vadd.f32 0.0, %v403
  %v405 = vpop.f32.mrb[0].mxu0
  %v406 = vpop.f32.mrb[0].mxu0
  %v407 = vpop.f32.mrb[0].mxu0
  %408 = vdwg.mxu0
  %v409 = vmul.f32 %v354, 0.35355338
  %v410 = vmul.f32 %v404, 0.35355338
  %v411 = vsel %vm88, %v409, -inf
  %412 = vmax.xlane.f32.xlu0 %v411
  %v413 = vpop.xlane.xlu0 %412
  %v414 = vsel %vm88, %v410, -inf
  %415 = vmax.xlane.f32.xlu0 %v414
  %v416 = vpop.xlane.xlu0 %415
  %v417 = vsub.f32 %v409, %v413
  %v418 = vsub.f32 %v410, %v416
  %v419 = vmul.f32 %v417, 1.442695
  %v420 = vpow.pop %v419
  %v421 = vmul.f32 %v418, 1.442695
  %v422 = vpow.pop %v421
  %v423 = vsel %vm88, %v420, 0.0
  %424 = vadd.xlane.f32.xlu0 %v423
  %v425 = vpop.xlane.xlu0 %424
  %v426 = vsel %vm88, %v422, 0.0
  %427 = vadd.xlane.f32.xlu0 %v426
  %v428 = vpop.xlane.xlu0 %427
  %v429 = vrcp.pop %v425
  %v430 = vmul.f32 %v420, %v429
  %v431 = vrcp.pop %v428
  %v432 = vmul.f32 %v422, %v431
  %v433 = vpack.c.bf16 %v430, %v430
  %v434 = vpack.c.bf16 %v432, %v432
  %435 = vrot.lane.b32.xlu0 %v83, 56
  %v436 = vpop.permute.xlu0 %435
  %v438 = vsel %vm88, %v433, 0
  %v441 = vsel %vm215, %v436, 0
  %443 = vmatprep.subr.bf16.mxu0 0
  %444 = vmatpush1.bf16.msra.mxu0 %v441
  %445 = vmatprep.subr.bf16.mxu0 0
  %446 = vmatpush1.bf16.msra.mxu0 0
  %447 = vmatprep.subr.bf16.mxu0 0
  %448 = vmatpush1.bf16.msra.mxu0 0
  %449 = vmatprep.subr.bf16.mxu0 0
  %450 = vmatpush1.bf16.msra.mxu0 0
  %451 = vmatprep.subr.bf16.mxu0 0
  %452 = vmatpush1.bf16.msra.mxu0 0
  %453 = vmatprep.subr.bf16.mxu0 0
  %454 = vmatpush1.bf16.msra.mxu0 0
  %455 = vmatprep.subr.bf16.mxu0 0
  %456 = vmatpush1.bf16.msra.mxu0 0
  %457 = vmatprep.subr.bf16.mxu0 0
  %458 = vmatpush1.bf16.msra.mxu0 0
  %459 = vmatprep.subr.bf16.mxu0 0
  %460 = vmatpush1.bf16.msra.mxu0 0
  %461 = vmatprep.subr.bf16.mxu0 0
  %462 = vmatpush1.bf16.msra.mxu0 0
  %463 = vmatprep.subr.bf16.mxu0 0
  %464 = vmatpush1.bf16.msra.mxu0 0
  %465 = vmatprep.subr.bf16.mxu0 0
  %466 = vmatpush1.bf16.msra.mxu0 0
  %467 = vmatprep.subr.bf16.mxu0 0
  %468 = vmatpush1.bf16.msra.mxu0 0
  %469 = vmatprep.subr.bf16.mxu0 0
  %470 = vmatpush1.bf16.msra.mxu0 0
  %471 = vmatprep.subr.bf16.mxu0 0
  %472 = vmatpush1.bf16.msra.mxu0 0
  %473 = vmatprep.subr.bf16.mxu0 0
  %474 = vmatpush1.bf16.msra.mxu0 0
  %475 = vmatprep.mubr.bf16.mxu0 0
  %476 = vmatmul.mubr.bf16.gmra.mrb[0].mxu0 %v438
  %v477 = vpop.f32.mrb[0].mxu0
  %v478 = vadd.f32 0.0, %v477
  %v479 = vpop.f32.mrb[0].mxu0
  %v480 = vpop.f32.mrb[0].mxu0
  %v481 = vpop.f32.mrb[0].mxu0
  %482 = vdwg.mxu0
  %483 = vrot.lane.b32.xlu0 %v84, 56
  %v484 = vpop.permute.xlu0 %483
  %v486 = vsel %vm88, %v434, 0
  %v489 = vsel %vm215, %v484, 0
  %491 = vmatprep.subr.bf16.mxu0 0
  %492 = vmatpush1.bf16.msra.mxu0 %v489
  %493 = vmatprep.subr.bf16.mxu0 0
  %494 = vmatpush1.bf16.msra.mxu0 0
  %495 = vmatprep.subr.bf16.mxu0 0
  %496 = vmatpush1.bf16.msra.mxu0 0
  %497 = vmatprep.subr.bf16.mxu0 0
  %498 = vmatpush1.bf16.msra.mxu0 0
  %499 = vmatprep.subr.bf16.mxu0 0
  %500 = vmatpush1.bf16.msra.mxu0 0
  %501 = vmatprep.subr.bf16.mxu0 0
  %502 = vmatpush1.bf16.msra.mxu0 0
  %503 = vmatprep.subr.bf16.mxu0 0
  %504 = vmatpush1.bf16.msra.mxu0 0
  %505 = vmatprep.subr.bf16.mxu0 0
  %506 = vmatpush1.bf16.msra.mxu0 0
  %507 = vmatprep.subr.bf16.mxu0 0
  %508 = vmatpush1.bf16.msra.mxu0 0
  %509 = vmatprep.subr.bf16.mxu0 0
  %510 = vmatpush1.bf16.msra.mxu0 0
  %511 = vmatprep.subr.bf16.mxu0 0
  %512 = vmatpush1.bf16.msra.mxu0 0
  %513 = vmatprep.subr.bf16.mxu0 0
  %514 = vmatpush1.bf16.msra.mxu0 0
  %515 = vmatprep.subr.bf16.mxu0 0
  %516 = vmatpush1.bf16.msra.mxu0 0
  %517 = vmatprep.subr.bf16.mxu0 0
  %518 = vmatpush1.bf16.msra.mxu0 0
  %519 = vmatprep.subr.bf16.mxu0 0
  %520 = vmatpush1.bf16.msra.mxu0 0
  %521 = vmatprep.subr.bf16.mxu0 0
  %522 = vmatpush1.bf16.msra.mxu0 0
  %523 = vmatprep.mubr.bf16.mxu0 0
  %524 = vmatmul.mubr.bf16.gmra.mrb[0].mxu0 %v486
  %v525 = vpop.f32.mrb[0].mxu0
  %v526 = vadd.f32 0.0, %v525
  %v527 = vpop.f32.mrb[0].mxu0
  %v528 = vpop.f32.mrb[0].mxu0
  %v529 = vpop.f32.mrb[0].mxu0
  %530 = vdwg.mxu0
  %v531 = vpack.c.bf16 %v526, %v478
  %v532 = vpack.c.bf16 %v80, %v80
  %v534 = vsel %vm88, %v531, 0
  %v537 = vsel %vm215, %v532, 0
  %539 = vmatprep.subr.bf16.mxu0 0
  %540 = vmatpush1.bf16.msra.mxu0 %v537
  %541 = vmatprep.subr.bf16.mxu0 0
  %542 = vmatpush1.bf16.msra.mxu0 0
  %543 = vmatprep.subr.bf16.mxu0 0
  %544 = vmatpush1.bf16.msra.mxu0 0
  %545 = vmatprep.subr.bf16.mxu0 0
  %546 = vmatpush1.bf16.msra.mxu0 0
  %547 = vmatprep.subr.bf16.mxu0 0
  %548 = vmatpush1.bf16.msra.mxu0 0
  %549 = vmatprep.subr.bf16.mxu0 0
  %550 = vmatpush1.bf16.msra.mxu0 0
  %551 = vmatprep.subr.bf16.mxu0 0
  %552 = vmatpush1.bf16.msra.mxu0 0
  %553 = vmatprep.subr.bf16.mxu0 0
  %554 = vmatpush1.bf16.msra.mxu0 0
  %555 = vmatprep.subr.bf16.mxu0 0
  %556 = vmatpush1.bf16.msra.mxu0 0
  %557 = vmatprep.subr.bf16.mxu0 0
  %558 = vmatpush1.bf16.msra.mxu0 0
  %559 = vmatprep.subr.bf16.mxu0 0
  %560 = vmatpush1.bf16.msra.mxu0 0
  %561 = vmatprep.subr.bf16.mxu0 0
  %562 = vmatpush1.bf16.msra.mxu0 0
  %563 = vmatprep.subr.bf16.mxu0 0
  %564 = vmatpush1.bf16.msra.mxu0 0
  %565 = vmatprep.subr.bf16.mxu0 0
  %566 = vmatpush1.bf16.msra.mxu0 0
  %567 = vmatprep.subr.bf16.mxu0 0
  %568 = vmatpush1.bf16.msra.mxu0 0
  %569 = vmatprep.subr.bf16.mxu0 0
  %570 = vmatpush1.bf16.msra.mxu0 0
  %571 = vmatprep.mubr.bf16.mxu0 0
  %572 = vmatmul.mubr.bf16.gmra.mrb[0].mxu0 %v534
  %v573 = vpop.f32.mrb[0].mxu0
  %v574 = vadd.f32 0.0, %v573
  %v575 = vpop.f32.mrb[0].mxu0
  %v576 = vpop.f32.mrb[0].mxu0
  %v577 = vadd.f32 0.0, %v576
  %v578 = vpop.f32.mrb[0].mxu0
  %579 = vdwg.mxu0
  %v581 = vsel %vm88, %v307, 0
  %v584 = vsel %vm215, %v308, 0
  %586 = vmatprep.subr.bf16.mxu0 0
  %587 = vmatpush1.bf16.msra.mxu0 %v584
  %588 = vmatprep.subr.bf16.mxu0 0
  %589 = vmatpush1.bf16.msra.mxu0 0
  %590 = vmatprep.subr.bf16.mxu0 0
  %591 = vmatpush1.bf16.msra.mxu0 0
  %592 = vmatprep.subr.bf16.mxu0 0
  %593 = vmatpush1.bf16.msra.mxu0 0
  %594 = vmatprep.subr.bf16.mxu0 0
  %595 = vmatpush1.bf16.msra.mxu0 0
  %596 = vmatprep.subr.bf16.mxu0 0
  %597 = vmatpush1.bf16.msra.mxu0 0
  %598 = vmatprep.subr.bf16.mxu0 0
  %599 = vmatpush1.bf16.msra.mxu0 0
  %600 = vmatprep.subr.bf16.mxu0 0
  %601 = vmatpush1.bf16.msra.mxu0 0
  %602 = vmatprep.subr.bf16.mxu0 0
  %603 = vmatpush1.bf16.msra.mxu0 0
  %604 = vmatprep.subr.bf16.mxu0 0
  %605 = vmatpush1.bf16.msra.mxu0 0
  %606 = vmatprep.subr.bf16.mxu0 0
  %607 = vmatpush1.bf16.msra.mxu0 0
  %608 = vmatprep.subr.bf16.mxu0 0
  %609 = vmatpush1.bf16.msra.mxu0 0
  %610 = vmatprep.subr.bf16.mxu0 0
  %611 = vmatpush1.bf16.msra.mxu0 0
  %612 = vmatprep.subr.bf16.mxu0 0
  %613 = vmatpush1.bf16.msra.mxu0 0
  %614 = vmatprep.subr.bf16.mxu0 0
  %615 = vmatpush1.bf16.msra.mxu0 0
  %616 = vmatprep.subr.bf16.mxu0 0
  %617 = vmatpush1.bf16.msra.mxu0 0
  %618 = vmatprep.mubr.bf16.mxu0 0
  %619 = vmatmul.mubr.bf16.gmra.mrb[0].mxu0 %v581
  %v620 = vpop.f32.mrb[0].mxu0
  %v621 = vadd.f32 %v574, %v620
  %v622 = vpop.f32.mrb[0].mxu0
  %v623 = vpop.f32.mrb[0].mxu0
  %v624 = vadd.f32 %v577, %v623
  %v625 = vpop.f32.mrb[0].mxu0
  %626 = vdwg.mxu0
  %627 = vrot.lane.b32.xlu0 %v83, 112
  %v628 = vpop.permute.xlu0 %627
  %629 = vrot.lane.b32.xlu0 %v83, 80
  %v630 = vpop.permute.xlu0 %629
  %v632 = vsel %vm88, %v628, 0
  %v635 = vsel %vm88, %v630, 0
  %637 = vmatprep.subr.bf16.mxu0 0
  %638 = vmatpush1.bf16.xpose.msra.mxu0 %v635
  %639 = vmatprep.subr.bf16.mxu0 0
  %640 = vmatpush1.bf16.xpose.msra.mxu0 0
  %641 = vmatprep.subr.bf16.mxu0 0
  %642 = vmatpush1.bf16.xpose.msra.mxu0 0
  %643 = vmatprep.subr.bf16.mxu0 0
  %644 = vmatpush1.bf16.xpose.msra.mxu0 0
  %645 = vmatprep.subr.bf16.mxu0 0
  %646 = vmatpush1.bf16.xpose.msra.mxu0 0
  %647 = vmatprep.subr.bf16.mxu0 0
  %648 = vmatpush1.bf16.xpose.msra.mxu0 0
  %649 = vmatprep.subr.bf16.mxu0 0
  %650 = vmatpush1.bf16.xpose.msra.mxu0 0
  %651 = vmatprep.subr.bf16.mxu0 0
  %652 = vmatpush1.bf16.xpose.msra.mxu0 0
  %653 = vmatprep.subr.bf16.mxu0 0
  %654 = vmatpush1.bf16.xpose.msra.mxu0 0
  %655 = vmatprep.subr.bf16.mxu0 0
  %656 = vmatpush1.bf16.xpose.msra.mxu0 0
  %657 = vmatprep.subr.bf16.mxu0 0
  %658 = vmatpush1.bf16.xpose.msra.mxu0 0
  %659 = vmatprep.subr.bf16.mxu0 0
  %660 = vmatpush1.bf16.xpose.msra.mxu0 0
  %661 = vmatprep.subr.bf16.mxu0 0
  %662 = vmatpush1.bf16.xpose.msra.mxu0 0
  %663 = vmatprep.subr.bf16.mxu0 0
  %664 = vmatpush1.bf16.xpose.msra.mxu0 0
  %665 = vmatprep.subr.bf16.mxu0 0
  %666 = vmatpush1.bf16.xpose.msra.mxu0 0
  %667 = vmatprep.subr.bf16.mxu0 0
  %668 = vmatpush1.bf16.xpose.msra.mxu0 0
  %669 = vmatprep.mubr.bf16.mxu0 0
  %670 = vmatmul.mubr.bf16.gmra.mrb[0].mxu0 %v632
  %v671 = vpop.f32.mrb[0].mxu0
  %v672 = vadd.f32 0.0, %v671
  %v673 = vpop.f32.mrb[0].mxu0
  %v674 = vpop.f32.mrb[0].mxu0
  %v675 = vpop.f32.mrb[0].mxu0
  %676 = vdwg.mxu0
  %677 = vrot.lane.b32.xlu0 %v84, 112
  %v678 = vpop.permute.xlu0 %677
  %679 = vrot.lane.b32.xlu0 %v84, 80
  %v680 = vpop.permute.xlu0 %679
  %v682 = vsel %vm88, %v678, 0
  %v685 = vsel %vm88, %v680, 0
  %687 = vmatprep.subr.bf16.mxu0 0
  %688 = vmatpush1.bf16.xpose.msra.mxu0 %v685
  %689 = vmatprep.subr.bf16.mxu0 0
  %690 = vmatpush1.bf16.xpose.msra.mxu0 0
  %691 = vmatprep.subr.bf16.mxu0 0
  %692 = vmatpush1.bf16.xpose.msra.mxu0 0
  %693 = vmatprep.subr.bf16.mxu0 0
  %694 = vmatpush1.bf16.xpose.msra.mxu0 0
  %695 = vmatprep.subr.bf16.mxu0 0
  %696 = vmatpush1.bf16.xpose.msra.mxu0 0
  %697 = vmatprep.subr.bf16.mxu0 0
  %698 = vmatpush1.bf16.xpose.msra.mxu0 0
  %699 = vmatprep.subr.bf16.mxu0 0
  %700 = vmatpush1.bf16.xpose.msra.mxu0 0
  %701 = vmatprep.subr.bf16.mxu0 0
  %702 = vmatpush1.bf16.xpose.msra.mxu0 0
  %703 = vmatprep.subr.bf16.mxu0 0
  %704 = vmatpush1.bf16.xpose.msra.mxu0 0
  %705 = vmatprep.subr.bf16.mxu0 0
  %706 = vmatpush1.bf16.xpose.msra.mxu0 0
  %707 = vmatprep.subr.bf16.mxu0 0
  %708 = vmatpush1.bf16.xpose.msra.mxu0 0
  %709 = vmatprep.subr.bf16.mxu0 0
  %710 = vmatpush1.bf16.xpose.msra.mxu0 0
  %711 = vmatprep.subr.bf16.mxu0 0
  %712 = vmatpush1.bf16.xpose.msra.mxu0 0
  %713 = vmatprep.subr.bf16.mxu0 0
  %714 = vmatpush1.bf16.xpose.msra.mxu0 0
  %715 = vmatprep.subr.bf16.mxu0 0
  %716 = vmatpush1.bf16.xpose.msra.mxu0 0
  %717 = vmatprep.subr.bf16.mxu0 0
  %718 = vmatpush1.bf16.xpose.msra.mxu0 0
  %719 = vmatprep.mubr.bf16.mxu0 0
  %720 = vmatmul.mubr.bf16.gmra.mrb[0].mxu0 %v682
  %v721 = vpop.f32.mrb[0].mxu0
  %v722 = vadd.f32 0.0, %v721
  %v723 = vpop.f32.mrb[0].mxu0
  %v724 = vpop.f32.mrb[0].mxu0
  %v725 = vpop.f32.mrb[0].mxu0
  %726 = vdwg.mxu0
  %v727 = vmul.f32 %v672, 0.35355338
  %v728 = vmul.f32 %v722, 0.35355338
  %v729 = vsel %vm88, %v727, -inf
  %730 = vmax.xlane.f32.xlu0 %v729
  %v731 = vpop.xlane.xlu0 %730
  %v732 = vsel %vm88, %v728, -inf
  %733 = vmax.xlane.f32.xlu0 %v732
  %v734 = vpop.xlane.xlu0 %733
  %v735 = vsub.f32 %v727, %v731
  %v736 = vsub.f32 %v728, %v734
  %v737 = vmul.f32 %v735, 1.442695
  %v738 = vpow.pop %v737
  %v739 = vmul.f32 %v736, 1.442695
  %v740 = vpow.pop %v739
  %v741 = vsel %vm88, %v738, 0.0
  %742 = vadd.xlane.f32.xlu0 %v741
  %v743 = vpop.xlane.xlu0 %742
  %v744 = vsel %vm88, %v740, 0.0
  %745 = vadd.xlane.f32.xlu0 %v744
  %v746 = vpop.xlane.xlu0 %745
  %v747 = vrcp.pop %v743
  %v748 = vmul.f32 %v738, %v747
  %v749 = vrcp.pop %v746
  %v750 = vmul.f32 %v740, %v749
  %v751 = vpack.c.bf16 %v748, %v748
  %v752 = vpack.c.bf16 %v750, %v750
  %753 = vrot.lane.b32.xlu0 %v83, 48
  %v754 = vpop.permute.xlu0 %753
  %v756 = vsel %vm88, %v751, 0
  %v759 = vsel %vm215, %v754, 0
  %761 = vmatprep.subr.bf16.mxu0 0
  %762 = vmatpush1.bf16.msra.mxu0 %v759
  %763 = vmatprep.subr.bf16.mxu0 0
  %764 = vmatpush1.bf16.msra.mxu0 0
  %765 = vmatprep.subr.bf16.mxu0 0
  %766 = vmatpush1.bf16.msra.mxu0 0
  %767 = vmatprep.subr.bf16.mxu0 0
  %768 = vmatpush1.bf16.msra.mxu0 0
  %769 = vmatprep.subr.bf16.mxu0 0
  %770 = vmatpush1.bf16.msra.mxu0 0
  %771 = vmatprep.subr.bf16.mxu0 0
  %772 = vmatpush1.bf16.msra.mxu0 0
  %773 = vmatprep.subr.bf16.mxu0 0
  %774 = vmatpush1.bf16.msra.mxu0 0
  %775 = vmatprep.subr.bf16.mxu0 0
  %776 = vmatpush1.bf16.msra.mxu0 0
  %777 = vmatprep.subr.bf16.mxu0 0
  %778 = vmatpush1.bf16.msra.mxu0 0
  %779 = vmatprep.subr.bf16.mxu0 0
  %780 = vmatpush1.bf16.msra.mxu0 0
  %781 = vmatprep.subr.bf16.mxu0 0
  %782 = vmatpush1.bf16.msra.mxu0 0
  %783 = vmatprep.subr.bf16.mxu0 0
  %784 = vmatpush1.bf16.msra.mxu0 0
  %785 = vmatprep.subr.bf16.mxu0 0
  %786 = vmatpush1.bf16.msra.mxu0 0
  %787 = vmatprep.subr.bf16.mxu0 0
  %788 = vmatpush1.bf16.msra.mxu0 0
  %789 = vmatprep.subr.bf16.mxu0 0
  %790 = vmatpush1.bf16.msra.mxu0 0
  %791 = vmatprep.subr.bf16.mxu0 0
  %792 = vmatpush1.bf16.msra.mxu0 0
  %793 = vmatprep.mubr.bf16.mxu0 0
  %794 = vmatmul.mubr.bf16.gmra.mrb[0].mxu0 %v756
  %v795 = vpop.f32.mrb[0].mxu0
  %v796 = vadd.f32 0.0, %v795
  %v797 = vpop.f32.mrb[0].mxu0
  %v798 = vpop.f32.mrb[0].mxu0
  %v799 = vpop.f32.mrb[0].mxu0
  %800 = vdwg.mxu0
  %801 = vrot.lane.b32.xlu0 %v84, 48
  %v802 = vpop.permute.xlu0 %801
  %v804 = vsel %vm88, %v752, 0
  %v807 = vsel %vm215, %v802, 0
  %809 = vmatprep.subr.bf16.mxu0 0
  %810 = vmatpush1.bf16.msra.mxu0 %v807
  %811 = vmatprep.subr.bf16.mxu0 0
  %812 = vmatpush1.bf16.msra.mxu0 0
  %813 = vmatprep.subr.bf16.mxu0 0
  %814 = vmatpush1.bf16.msra.mxu0 0
  %815 = vmatprep.subr.bf16.mxu0 0
  %816 = vmatpush1.bf16.msra.mxu0 0
  %817 = vmatprep.subr.bf16.mxu0 0
  %818 = vmatpush1.bf16.msra.mxu0 0
  %819 = vmatprep.subr.bf16.mxu0 0
  %820 = vmatpush1.bf16.msra.mxu0 0
  %821 = vmatprep.subr.bf16.mxu0 0
  %822 = vmatpush1.bf16.msra.mxu0 0
  %823 = vmatprep.subr.bf16.mxu0 0
  %824 = vmatpush1.bf16.msra.mxu0 0
  %825 = vmatprep.subr.bf16.mxu0 0
  %826 = vmatpush1.bf16.msra.mxu0 0
  %827 = vmatprep.subr.bf16.mxu0 0
  %828 = vmatpush1.bf16.msra.mxu0 0
  %829 = vmatprep.subr.bf16.mxu0 0
  %830 = vmatpush1.bf16.msra.mxu0 0
  %831 = vmatprep.subr.bf16.mxu0 0
  %832 = vmatpush1.bf16.msra.mxu0 0
  %833 = vmatprep.subr.bf16.mxu0 0
  %834 = vmatpush1.bf16.msra.mxu0 0
  %835 = vmatprep.subr.bf16.mxu0 0
  %836 = vmatpush1.bf16.msra.mxu0 0
  %837 = vmatprep.subr.bf16.mxu0 0
  %838 = vmatpush1.bf16.msra.mxu0 0
  %839 = vmatprep.subr.bf16.mxu0 0
  %840 = vmatpush1.bf16.msra.mxu0 0
  %841 = vmatprep.mubr.bf16.mxu0 0
  %842 = vmatmul.mubr.bf16.gmra.mrb[0].mxu0 %v804
  %v843 = vpop.f32.mrb[0].mxu0
  %v844 = vadd.f32 0.0, %v843
  %v845 = vpop.f32.mrb[0].mxu0
  %v846 = vpop.f32.mrb[0].mxu0
  %v847 = vpop.f32.mrb[0].mxu0
  %848 = vdwg.mxu0
  %v849 = vpack.c.bf16 %v844, %v796
  %v850 = vpack.c.bf16 %v81, %v81
  %v852 = vsel %vm88, %v849, 0
  %v855 = vsel %vm215, %v850, 0
  %857 = vmatprep.subr.bf16.mxu0 0
  %858 = vmatpush1.bf16.msra.mxu0 %v855
  %859 = vmatprep.subr.bf16.mxu0 0
  %860 = vmatpush1.bf16.msra.mxu0 0
  %861 = vmatprep.subr.bf16.mxu0 0
  %862 = vmatpush1.bf16.msra.mxu0 0
  %863 = vmatprep.subr.bf16.mxu0 0
  %864 = vmatpush1.bf16.msra.mxu0 0
  %865 = vmatprep.subr.bf16.mxu0 0
  %866 = vmatpush1.bf16.msra.mxu0 0
  %867 = vmatprep.subr.bf16.mxu0 0
  %868 = vmatpush1.bf16.msra.mxu0 0
  %869 = vmatprep.subr.bf16.mxu0 0
  %870 = vmatpush1.bf16.msra.mxu0 0
  %871 = vmatprep.subr.bf16.mxu0 0
  %872 = vmatpush1.bf16.msra.mxu0 0
  %873 = vmatprep.subr.bf16.mxu0 0
  %874 = vmatpush1.bf16.msra.mxu0 0
  %875 = vmatprep.subr.bf16.mxu0 0
  %876 = vmatpush1.bf16.msra.mxu0 0
  %877 = vmatprep.subr.bf16.mxu0 0
  %878 = vmatpush1.bf16.msra.mxu0 0
  %879 = vmatprep.subr.bf16.mxu0 0
  %880 = vmatpush1.bf16.msra.mxu0 0
  %881 = vmatprep.subr.bf16.mxu0 0
  %882 = vmatpush1.bf16.msra.mxu0 0
  %883 = vmatprep.subr.bf16.mxu0 0
  %884 = vmatpush1.bf16.msra.mxu0 0
  %885 = vmatprep.subr.bf16.mxu0 0
  %886 = vmatpush1.bf16.msra.mxu0 0
  %887 = vmatprep.subr.bf16.mxu0 0
  %888 = vmatpush1.bf16.msra.mxu0 0
  %889 = vmatprep.mubr.bf16.mxu0 0
  %890 = vmatmul.mubr.bf16.gmra.mrb[0].mxu0 %v852
  %v891 = vpop.f32.mrb[0].mxu0
  %v892 = vadd.f32 0.0, %v891
  %v893 = vpop.f32.mrb[0].mxu0
  %v894 = vpop.f32.mrb[0].mxu0
  %v895 = vadd.f32 0.0, %v894
  %v896 = vpop.f32.mrb[0].mxu0
  %897 = vdwg.mxu0
  %v898 = vadd.f32 %v621, %v892
  %v899 = vadd.f32 %v624, %v895
  %900 = vrot.lane.b32.xlu0 %v83, 104
  %v901 = vpop.permute.xlu0 %900
  %902 = vrot.lane.b32.xlu0 %v83, 72
  %v903 = vpop.permute.xlu0 %902
  %v905 = vsel %vm88, %v901, 0
  %v908 = vsel %vm88, %v903, 0
  %910 = vmatprep.subr.bf16.mxu0 0
  %911 = vmatpush1.bf16.xpose.msra.mxu0 %v908
  %912 = vmatprep.subr.bf16.mxu0 0
  %913 = vmatpush1.bf16.xpose.msra.mxu0 0
  %914 = vmatprep.subr.bf16.mxu0 0
  %915 = vmatpush1.bf16.xpose.msra.mxu0 0
  %916 = vmatprep.subr.bf16.mxu0 0
  %917 = vmatpush1.bf16.xpose.msra.mxu0 0
  %918 = vmatprep.subr.bf16.mxu0 0
  %919 = vmatpush1.bf16.xpose.msra.mxu0 0
  %920 = vmatprep.subr.bf16.mxu0 0
  %921 = vmatpush1.bf16.xpose.msra.mxu0 0
  %922 = vmatprep.subr.bf16.mxu0 0
  %923 = vmatpush1.bf16.xpose.msra.mxu0 0
  %924 = vmatprep.subr.bf16.mxu0 0
  %925 = vmatpush1.bf16.xpose.msra.mxu0 0
  %926 = vmatprep.subr.bf16.mxu0 0
  %927 = vmatpush1.bf16.xpose.msra.mxu0 0
  %928 = vmatprep.subr.bf16.mxu0 0
  %929 = vmatpush1.bf16.xpose.msra.mxu0 0
  %930 = vmatprep.subr.bf16.mxu0 0
  %931 = vmatpush1.bf16.xpose.msra.mxu0 0
  %932 = vmatprep.subr.bf16.mxu0 0
  %933 = vmatpush1.bf16.xpose.msra.mxu0 0
  %934 = vmatprep.subr.bf16.mxu0 0
  %935 = vmatpush1.bf16.xpose.msra.mxu0 0
  %936 = vmatprep.subr.bf16.mxu0 0
  %937 = vmatpush1.bf16.xpose.msra.mxu0 0
  %938 = vmatprep.subr.bf16.mxu0 0
  %939 = vmatpush1.bf16.xpose.msra.mxu0 0
  %940 = vmatprep.subr.bf16.mxu0 0
  %941 = vmatpush1.bf16.xpose.msra.mxu0 0
  %942 = vmatprep.mubr.bf16.mxu0 0
  %943 = vmatmul.mubr.bf16.gmra.mrb[0].mxu0 %v905
  %v944 = vpop.f32.mrb[0].mxu0
  %v945 = vadd.f32 0.0, %v944
  %v946 = vpop.f32.mrb[0].mxu0
  %v947 = vpop.f32.mrb[0].mxu0
  %v948 = vpop.f32.mrb[0].mxu0
  %949 = vdwg.mxu0
  %950 = vrot.lane.b32.xlu0 %v84, 104
  %v951 = vpop.permute.xlu0 %950
  %952 = vrot.lane.b32.xlu0 %v84, 72
  %v953 = vpop.permute.xlu0 %952
  %v955 = vsel %vm88, %v951, 0
  %v958 = vsel %vm88, %v953, 0
  %960 = vmatprep.subr.bf16.mxu0 0
  %961 = vmatpush1.bf16.xpose.msra.mxu0 %v958
  %962 = vmatprep.subr.bf16.mxu0 0
  %963 = vmatpush1.bf16.xpose.msra.mxu0 0
  %964 = vmatprep.subr.bf16.mxu0 0
  %965 = vmatpush1.bf16.xpose.msra.mxu0 0
  %966 = vmatprep.subr.bf16.mxu0 0
  %967 = vmatpush1.bf16.xpose.msra.mxu0 0
  %968 = vmatprep.subr.bf16.mxu0 0
  %969 = vmatpush1.bf16.xpose.msra.mxu0 0
  %970 = vmatprep.subr.bf16.mxu0 0
  %971 = vmatpush1.bf16.xpose.msra.mxu0 0
  %972 = vmatprep.subr.bf16.mxu0 0
  %973 = vmatpush1.bf16.xpose.msra.mxu0 0
  %974 = vmatprep.subr.bf16.mxu0 0
  %975 = vmatpush1.bf16.xpose.msra.mxu0 0
  %976 = vmatprep.subr.bf16.mxu0 0
  %977 = vmatpush1.bf16.xpose.msra.mxu0 0
  %978 = vmatprep.subr.bf16.mxu0 0
  %979 = vmatpush1.bf16.xpose.msra.mxu0 0
  %980 = vmatprep.subr.bf16.mxu0 0
  %981 = vmatpush1.bf16.xpose.msra.mxu0 0
  %982 = vmatprep.subr.bf16.mxu0 0
  %983 = vmatpush1.bf16.xpose.msra.mxu0 0
  %984 = vmatprep.subr.bf16.mxu0 0
  %985 = vmatpush1.bf16.xpose.msra.mxu0 0
  %986 = vmatprep.subr.bf16.mxu0 0
  %987 = vmatpush1.bf16.xpose.msra.mxu0 0
  %988 = vmatprep.subr.bf16.mxu0 0
  %989 = vmatpush1.bf16.xpose.msra.mxu0 0
  %990 = vmatprep.subr.bf16.mxu0 0
  %991 = vmatpush1.bf16.xpose.msra.mxu0 0
  %992 = vmatprep.mubr.bf16.mxu0 0
  %993 = vmatmul.mubr.bf16.gmra.mrb[0].mxu0 %v955
  %v994 = vpop.f32.mrb[0].mxu0
  %v995 = vadd.f32 0.0, %v994
  %v996 = vpop.f32.mrb[0].mxu0
  %v997 = vpop.f32.mrb[0].mxu0
  %v998 = vpop.f32.mrb[0].mxu0
  %999 = vdwg.mxu0
  %v1000 = vmul.f32 %v945, 0.35355338
  %v1001 = vmul.f32 %v995, 0.35355338
  %v1002 = vsel %vm88, %v1000, -inf
  %1003 = vmax.xlane.f32.xlu0 %v1002
  %v1004 = vpop.xlane.xlu0 %1003
  %v1005 = vsel %vm88, %v1001, -inf
  %1006 = vmax.xlane.f32.xlu0 %v1005
  %v1007 = vpop.xlane.xlu0 %1006
  %v1008 = vsub.f32 %v1000, %v1004
  %v1009 = vsub.f32 %v1001, %v1007
  %v1010 = vmul.f32 %v1008, 1.442695
  %v1011 = vpow.pop %v1010
  %v1012 = vmul.f32 %v1009, 1.442695
  %v1013 = vpow.pop %v1012
  %v1014 = vsel %vm88, %v1011, 0.0
  %1015 = vadd.xlane.f32.xlu0 %v1014
  %v1016 = vpop.xlane.xlu0 %1015
  %v1017 = vsel %vm88, %v1013, 0.0
  %1018 = vadd.xlane.f32.xlu0 %v1017
  %v1019 = vpop.xlane.xlu0 %1018
  %v1020 = vrcp.pop %v1016
  %v1021 = vmul.f32 %v1011, %v1020
  %v1022 = vrcp.pop %v1019
  %v1023 = vmul.f32 %v1013, %v1022
  %v1024 = vpack.c.bf16 %v1021, %v1021
  %v1025 = vpack.c.bf16 %v1023, %v1023
  %1026 = vrot.lane.b32.xlu0 %v83, 40
  %v1027 = vpop.permute.xlu0 %1026
  %v1029 = vsel %vm88, %v1024, 0
  %v1032 = vsel %vm215, %v1027, 0
  %1034 = vmatprep.subr.bf16.mxu0 0
  %1035 = vmatpush1.bf16.msra.mxu0 %v1032
  %1036 = vmatprep.subr.bf16.mxu0 0
  %1037 = vmatpush1.bf16.msra.mxu0 0
  %1038 = vmatprep.subr.bf16.mxu0 0
  %1039 = vmatpush1.bf16.msra.mxu0 0
  %1040 = vmatprep.subr.bf16.mxu0 0
  %1041 = vmatpush1.bf16.msra.mxu0 0
  %1042 = vmatprep.subr.bf16.mxu0 0
  %1043 = vmatpush1.bf16.msra.mxu0 0
  %1044 = vmatprep.subr.bf16.mxu0 0
  %1045 = vmatpush1.bf16.msra.mxu0 0
  %1046 = vmatprep.subr.bf16.mxu0 0
  %1047 = vmatpush1.bf16.msra.mxu0 0
  %1048 = vmatprep.subr.bf16.mxu0 0
  %1049 = vmatpush1.bf16.msra.mxu0 0
  %1050 = vmatprep.subr.bf16.mxu0 0
  %1051 = vmatpush1.bf16.msra.mxu0 0
  %1052 = vmatprep.subr.bf16.mxu0 0
  %1053 = vmatpush1.bf16.msra.mxu0 0
  %1054 = vmatprep.subr.bf16.mxu0 0
  %1055 = vmatpush1.bf16.msra.mxu0 0
  %1056 = vmatprep.subr.bf16.mxu0 0
  %1057 = vmatpush1.bf16.msra.mxu0 0
  %1058 = vmatprep.subr.bf16.mxu0 0
  %1059 = vmatpush1.bf16.msra.mxu0 0
  %1060 = vmatprep.subr.bf16.mxu0 0
  %1061 = vmatpush1.bf16.msra.mxu0 0
  %1062 = vmatprep.subr.bf16.mxu0 0
  %1063 = vmatpush1.bf16.msra.mxu0 0
  %1064 = vmatprep.subr.bf16.mxu0 0
  %1065 = vmatpush1.bf16.msra.mxu0 0
  %1066 = vmatprep.mubr.bf16.mxu0 0
  %1067 = vmatmul.mubr.bf16.gmra.mrb[0].mxu0 %v1029
  %v1068 = vpop.f32.mrb[0].mxu0
  %v1069 = vadd.f32 0.0, %v1068
  %v1070 = vpop.f32.mrb[0].mxu0
  %v1071 = vpop.f32.mrb[0].mxu0
  %v1072 = vpop.f32.mrb[0].mxu0
  %1073 = vdwg.mxu0
  %1074 = vrot.lane.b32.xlu0 %v84, 40
  %v1075 = vpop.permute.xlu0 %1074
  %v1077 = vsel %vm88, %v1025, 0
  %v1080 = vsel %vm215, %v1075, 0
  %1082 = vmatprep.subr.bf16.mxu0 0
  %1083 = vmatpush1.bf16.msra.mxu0 %v1080
  %1084 = vmatprep.subr.bf16.mxu0 0
  %1085 = vmatpush1.bf16.msra.mxu0 0
  %1086 = vmatprep.subr.bf16.mxu0 0
  %1087 = vmatpush1.bf16.msra.mxu0 0
  %1088 = vmatprep.subr.bf16.mxu0 0
  %1089 = vmatpush1.bf16.msra.mxu0 0
  %1090 = vmatprep.subr.bf16.mxu0 0
  %1091 = vmatpush1.bf16.msra.mxu0 0
  %1092 = vmatprep.subr.bf16.mxu0 0
  %1093 = vmatpush1.bf16.msra.mxu0 0
  %1094 = vmatprep.subr.bf16.mxu0 0
  %1095 = vmatpush1.bf16.msra.mxu0 0
  %1096 = vmatprep.subr.bf16.mxu0 0
  %1097 = vmatpush1.bf16.msra.mxu0 0
  %1098 = vmatprep.subr.bf16.mxu0 0
  %1099 = vmatpush1.bf16.msra.mxu0 0
  %1100 = vmatprep.subr.bf16.mxu0 0
  %1101 = vmatpush1.bf16.msra.mxu0 0
  %1102 = vmatprep.subr.bf16.mxu0 0
  %1103 = vmatpush1.bf16.msra.mxu0 0
  %1104 = vmatprep.subr.bf16.mxu0 0
  %1105 = vmatpush1.bf16.msra.mxu0 0
  %1106 = vmatprep.subr.bf16.mxu0 0
  %1107 = vmatpush1.bf16.msra.mxu0 0
  %1108 = vmatprep.subr.bf16.mxu0 0
  %1109 = vmatpush1.bf16.msra.mxu0 0
  %1110 = vmatprep.subr.bf16.mxu0 0
  %1111 = vmatpush1.bf16.msra.mxu0 0
  %1112 = vmatprep.subr.bf16.mxu0 0
  %1113 = vmatpush1.bf16.msra.mxu0 0
  %1114 = vmatprep.mubr.bf16.mxu0 0
  %1115 = vmatmul.mubr.bf16.gmra.mrb[0].mxu0 %v1077
  %v1116 = vpop.f32.mrb[0].mxu0
  %v1117 = vadd.f32 0.0, %v1116
  %v1118 = vpop.f32.mrb[0].mxu0
  %v1119 = vpop.f32.mrb[0].mxu0
  %v1120 = vpop.f32.mrb[0].mxu0
  %1121 = vdwg.mxu0
  %v1122 = vpack.c.bf16 %v1117, %v1069
  %v1123 = vpack.c.bf16 %v82, %v82
  %v1125 = vsel %vm88, %v1122, 0
  %v1128 = vsel %vm215, %v1123, 0
  %1130 = vmatprep.subr.bf16.mxu0 0
  %1131 = vmatpush1.bf16.msra.mxu0 %v1128
  %1132 = vmatprep.subr.bf16.mxu0 0
  %1133 = vmatpush1.bf16.msra.mxu0 0
  %1134 = vmatprep.subr.bf16.mxu0 0
  %1135 = vmatpush1.bf16.msra.mxu0 0
  %1136 = vmatprep.subr.bf16.mxu0 0
  %1137 = vmatpush1.bf16.msra.mxu0 0
  %1138 = vmatprep.subr.bf16.mxu0 0
  %1139 = vmatpush1.bf16.msra.mxu0 0
  %1140 = vmatprep.subr.bf16.mxu0 0
  %1141 = vmatpush1.bf16.msra.mxu0 0
  %1142 = vmatprep.subr.bf16.mxu0 0
  %1143 = vmatpush1.bf16.msra.mxu0 0
  %1144 = vmatprep.subr.bf16.mxu0 0
  %1145 = vmatpush1.bf16.msra.mxu0 0
  %1146 = vmatprep.subr.bf16.mxu0 0
  %1147 = vmatpush1.bf16.msra.mxu0 0
  %1148 = vmatprep.subr.bf16.mxu0 0
  %1149 = vmatpush1.bf16.msra.mxu0 0
  %1150 = vmatprep.subr.bf16.mxu0 0
  %1151 = vmatpush1.bf16.msra.mxu0 0
  %1152 = vmatprep.subr.bf16.mxu0 0
  %1153 = vmatpush1.bf16.msra.mxu0 0
  %1154 = vmatprep.subr.bf16.mxu0 0
  %1155 = vmatpush1.bf16.msra.mxu0 0
  %1156 = vmatprep.subr.bf16.mxu0 0
  %1157 = vmatpush1.bf16.msra.mxu0 0
  %1158 = vmatprep.subr.bf16.mxu0 0
  %1159 = vmatpush1.bf16.msra.mxu0 0
  %1160 = vmatprep.subr.bf16.mxu0 0
  %1161 = vmatpush1.bf16.msra.mxu0 0
  %1162 = vmatprep.mubr.bf16.mxu0 0
  %1163 = vmatmul.mubr.bf16.gmra.mrb[0].mxu0 %v1125
  %v1164 = vpop.f32.mrb[0].mxu0
  %v1165 = vadd.f32 0.0, %v1164
  %v1166 = vpop.f32.mrb[0].mxu0
  %v1167 = vpop.f32.mrb[0].mxu0
  %v1168 = vadd.f32 0.0, %v1167
  %v1169 = vpop.f32.mrb[0].mxu0
  %1170 = vdwg.mxu0
  %v1171 = vadd.f32 %v898, %v1165
  %v1172 = vadd.f32 %v899, %v1168
  %v1173 = vmul.f32 %v1171, 2.0
  %v1174 = vmul.f32 %v1172, 2.0
  %1175 = vst.msk [vmem:[%s3] sm:$0xff] %vm34, %v1173
  %1176 = vst.msk [vmem:[%s3 + $0x8] sm:$0xff] %vm34, %v1174
  // Predicated region
  $region14: #{mha_layer_forward.4} parent=0 // pred_check
    _
  $region15: #{mha_layer_forward.4} parent=0 // pred_check_branch
    %1178 = sbr.rel (0) target = $region17
  $region16: #{mha_layer_forward.4} parent=0 // pred_region
    _
  $region17: #{mha_layer_forward.4} parent=0 // pred_fallthru
    _
  // Predicated region
  $region18: #{mha_layer_forward.4} parent=0 // pred_check
    _
  $region19: #{mha_layer_forward.4} parent=0 // pred_check_branch
    %1180 = sbr.rel (0) target = $region21
  $region20: #{mha_layer_forward.4} parent=0 // pred_region
    _
  $region21: #{mha_layer_forward.4} parent=0 // pred_fallthru
    _

</llo_original>
